<compile_context>
chip_gen: v7x
topology: tpu7x:2x2x1
jax: 0.10.0
libtpu: 0.0.40
codegen_flags: <defaults>
</compile_context>

<pallas_src>
import jax
import jax.numpy as jnp
from jax.experimental import pallas as pl
from jax.experimental.pallas import tpu as pltpu


def _round_up(x: int, m: int) -> int:
    return (x + m - 1) // m * m


def _largest_divisor_multiple(dim: int, preferred: int, align: int):
    """Largest multiple of `align` that divides `dim`, capped at `preferred`."""
    best = None
    t = align
    while t <= min(preferred, dim):
        if dim % t == 0:
            best = t
        t += align
    return best


def _tpu_vmem_capacity() -> int:
    try:
        return int(pltpu.get_tpu_info().vmem_capacity_bytes)
    except Exception:
        return 64 * 2**20  # conservative (v7x-sized) fallback


def residual_linear(x, w, b, *, tm=None, tn=None, tk=None, use_bf16=True):
    """out = x + x @ w + b.

    x: (B, S, H); w: (H, H) pre-transposed nn.Linear weight; b: (H,).
    """
    B, S, H = x.shape
    assert w.shape == (H, H), "Residual(Linear) requires a square weight"
    assert b.shape == (H,)
    M = B * S
    K = H

    # ----- per-generation VMEM budget & tile preferences -------------------
    vmem_cap = _tpu_vmem_capacity()
    budget = max(vmem_cap - 16 * 2**20, 16 * 2**20)   # headroom for Mosaic scratch
    big_vmem = vmem_cap >= 96 * 2**20                 # v5e/v6e (128 MiB) vs v7x (64 MiB)

    tm_pref = tm if tm is not None else (512 if big_vmem else 256)
    tn_pref = tn if tn is not None else (512 if big_vmem else 256)

    # lane-dense output tile (multiple of 128) dividing H; small / unaligned H
    # falls back to the whole dim (legal block; masked stores only).
    tn_sel = _largest_divisor_multiple(H, tn_pref, 128)
    if tn_sel is None:
        tn_sel = H

    # row tile never exceeds the preferred size: pad M instead of widening.
    if M <= tm_pref:
        tm_sel = _round_up(M, 8)
        M_pad = tm_sel
    else:
        tm_sel = tm_pref
        M_pad = _round_up(M, tm_sel)

    x2 = x.reshape(M, H)
    if M_pad != M:
        x2 = jnp.pad(x2, ((0, M_pad - M), (0, 0)))
    w_mx = w.astype(jnp.bfloat16) if use_bf16 else w
    b2 = b.reshape(1, H)

    isx = jnp.dtype(x.dtype).itemsize
    isw = jnp.dtype(w_mx.dtype).itemsize
    iso = jnp.dtype(x.dtype).itemsize

    def _panel_bytes(tk_):
        # one grid step, counting double buffering of every streamed block
        return 2 * (tm_sel * tk_ * isx            # x row panel
                    + tk_ * tn_sel * isw          # weight column panel
                    + tn_sel * 4                  # bias slice (tiny)
                    + tm_sel * tn_sel * iso)      # output tile

    # ----- reduction (K) tiling decision ------------------------------------
    if tk is not None:
        tk_sel = int(tk)
        assert K % tk_sel == 0 and tk_sel % tn_sel == 0, \
            "tk must divide K and be a multiple of tn"
    elif _panel_bytes(K) <= budget // 2:
        tk_sel = K                                # whole-K path
    else:
        tk_sel = tn_sel                           # always legal (tn divides H=K)
        t = tn_sel
        while t < K:
            if K % t == 0 and _panel_bytes(t) <= budget // 2:
                tk_sel = t
            t += tn_sel

    k_steps = K // tk_sel
    acc_bytes = tm_sel * tn_sel * 4 if k_steps > 1 else 0
    needed = _panel_bytes(tk_sel) + acc_bytes + 2 * 2**20
    vmem_limit = int(min(budget, max(needed, 32 * 2**20)))

    grid_mn = (M_pad // tm_sel, H // tn_sel)
    out_shape = jax.ShapeDtypeStruct((M_pad, H), x.dtype)

    # ----- kernels -----------------------------------------------------------
    def _kernel_whole_k(x_ref, w_ref, b_ref, o_ref):
        j = pl.program_id(1)
        xv = x_ref[...]
        lhs = xv.astype(jnp.bfloat16) if use_bf16 else xv
        y = jnp.dot(lhs, w_ref[...], preferred_element_type=jnp.float32)
        if tn_sel == K:
            res = xv                              # residual is the whole panel
        else:
            off = pl.multiple_of(j * tn_sel, 128)
            res = x_ref[:, pl.ds(off, tn_sel)]    # residual slice of resident panel
        y = y + b_ref[...].astype(jnp.float32) + res.astype(jnp.float32)
        o_ref[...] = y.astype(o_ref.dtype)

    def _kernel_tiled_k(x_ref, w_ref, b_ref, o_ref, acc_ref):
        j = pl.program_id(1)
        k = pl.program_id(2)

        @pl.when(k == 0)
        def _init():
            acc_ref[...] = jnp.zeros_like(acc_ref)

        xv = x_ref[...]
        lhs = xv.astype(jnp.bfloat16) if use_bf16 else xv
        acc_ref[...] += jnp.dot(lhs, w_ref[...],
                                preferred_element_type=jnp.float32)

        # residual columns [j*tn, j*tn+tn) of x live in K-tile (j*tn)//tk;
        # tk is a multiple of tn so the slice never crosses a K-tile boundary.
        @pl.when(k == (j * tn_sel) // tk_sel)
        def _residual():
            off = pl.multiple_of((j * tn_sel) % tk_sel, 128)
            acc_ref[...] += x_ref[:, pl.ds(off, tn_sel)].astype(jnp.float32)

        @pl.when(k == pl.num_programs(2) - 1)
        def _finalize():
            o_ref[...] = (acc_ref[...]
                          + b_ref[...].astype(jnp.float32)).astype(o_ref.dtype)

    # ----- pallas_call -------------------------------------------------------
    if k_steps == 1:
        out = pl.pallas_call(
            _kernel_whole_k,
            out_shape=out_shape,
            grid_spec=pltpu.PrefetchScalarGridSpec(
                num_scalar_prefetch=0,
                grid=grid_mn,
                in_specs=[
                    # x row panel: constant across inner j -> fetched once per i
                    pl.BlockSpec((tm_sel, K), lambda i, j: (i, 0)),
                    # bf16 weight column panel streamed over j
                    pl.BlockSpec((K, tn_sel), lambda i, j: (0, j)),
                    # bias slice
                    pl.BlockSpec((1, tn_sel), lambda i, j: (0, j)),
                ],
                out_specs=pl.BlockSpec((tm_sel, tn_sel), lambda i, j: (i, j)),
            ),
            compiler_params=pltpu.CompilerParams(
                dimension_semantics=("parallel", "parallel"),
                vmem_limit_bytes=vmem_limit,
            ),
        )(x2, w_mx, b2)
    else:
        out = pl.pallas_call(
            _kernel_tiled_k,
            out_shape=out_shape,
            grid_spec=pltpu.PrefetchScalarGridSpec(
                num_scalar_prefetch=0,
                grid=(grid_mn[0], grid_mn[1], k_steps),
                in_specs=[
                    pl.BlockSpec((tm_sel, tk_sel), lambda i, j, k: (i, k)),
                    pl.BlockSpec((tk_sel, tn_sel), lambda i, j, k: (k, j)),
                    pl.BlockSpec((1, tn_sel), lambda i, j, k: (0, j)),
                ],
                out_specs=pl.BlockSpec((tm_sel, tn_sel),
                                       lambda i, j, k: (i, j)),
                scratch_shapes=[pltpu.VMEM((tm_sel, tn_sel), jnp.float32)],
            ),
            compiler_params=pltpu.CompilerParams(
                dimension_semantics=("parallel", "parallel", "arbitrary"),
                vmem_limit_bytes=vmem_limit,
            ),
        )(x2, w_mx, b2)

    if M_pad != M:
        out = out[:M]
    return out.reshape(B, S, H)


def reference(x, w, b, use_bf16=True):
    # pure-JAX reference of Residual(Linear): x + x @ w + b
    # (matches the kernel's bf16-operand / f32-accumulate matmul when use_bf16)
    dt = jnp.bfloat16 if use_bf16 else jnp.float32
    y = jnp.einsum("bsh,hk->bsk", x.astype(dt), w.astype(dt),
                   preferred_element_type=jnp.float32)
    return (x.astype(jnp.float32) + y + b.astype(jnp.float32)).astype(x.dtype)


if __name__ == "__main__":
    key = jax.random.PRNGKey(0)
    keys = jax.random.split(key, 9)

    def make(B, S, H, kx, kw, kb):
        x = jax.random.normal(kx, (B, S, H), dtype=jnp.float32)
        w = jax.random.normal(kw, (H, H), dtype=jnp.float32) / jnp.sqrt(H)
        b = jax.random.normal(kb, (H,), dtype=jnp.float32) * 0.1
        return x, w, b

    # 1) whole-K path: M = B*S = 512, H = 512 (lane-dense tiles, bf16 MXU operands)
    x, w, b = make(2, 256, 512, keys[0], keys[1], keys[2])
    out = jax.block_until_ready(residual_linear(x, w, b))
    ref = reference(x, w, b)
    assert out.shape == x.shape
    assert jnp.allclose(out, ref, atol=2e-3, rtol=2e-3), "whole-K path mismatch"

    # 2) forced K-tiled path (f32 accumulator + pl.when init/residual/finalize)
    x2, w2, b2 = make(2, 128, 512, keys[3], keys[4], keys[5])
    out2 = jax.block_until_ready(
        residual_linear(x2, w2, b2, tm=128, tn=128, tk=256))
    ref2 = reference(x2, w2, b2)
    assert jnp.allclose(out2, ref2, atol=2e-3, rtol=2e-3), "K-tiled path mismatch"

    # 3) non-multiple-of-8 M exercises the pad-instead-of-widen row tiling
    x3, w3, b3 = make(1, 100, 256, keys[6], keys[7], keys[8])
    out3 = jax.block_until_ready(residual_linear(x3, w3, b3))
    ref3 = reference(x3, w3, b3)
    assert jnp.allclose(out3, ref3, atol=2e-3, rtol=2e-3), "padded-M path mismatch"

    print("KERNEL_OK")
</pallas_src>

<mosaic_0001>
module attributes {stable_mosaic.version = 11 : i64} {
  func.func @_kernel_whole_k(%arg0: i32, %arg1: i32, %arg2: memref<256x512xf32, #tpu.memory_space<vmem>>, %arg3: memref<512x256xbf16, #tpu.memory_space<vmem>>, %arg4: memref<1x256xf32, #tpu.memory_space<vmem>>, %arg5: memref<256x256xf32, #tpu.memory_space<vmem>>) attributes {dimension_semantics = [#tpu.dimension_semantics<parallel>, #tpu.dimension_semantics<parallel>], iteration_bounds = array<i64: 2, 2>, scalar_prefetch = 0 : i64, scratch_operands = 0 : i64, tpu.core_type = #tpu.core_type<tc>, window_params = [{transform_indices = @transform_0, window_bounds = array<i64: 256, 512>}, {transform_indices = @transform_1, window_bounds = array<i64: 512, 256>}, {transform_indices = @transform_2, window_bounds = array<i64: 1, 256>}, {transform_indices = @transform_3, window_bounds = array<i64: 256, 256>}]} {
    %c0 = arith.constant 0 : index
    %c0_0 = arith.constant 0 : index
    %0 = vector.load %arg2[%c0, %c0_0] : memref<256x512xf32, #tpu.memory_space<vmem>>, vector<256x512xf32>
    %1 = arith.truncf %0 : vector<256x512xf32> to vector<256x512xbf16>
    %c0_1 = arith.constant 0 : index
    %c0_2 = arith.constant 0 : index
    %2 = vector.load %arg3[%c0_1, %c0_2] : memref<512x256xbf16, #tpu.memory_space<vmem>>, vector<512x256xbf16>
    %cst = arith.constant dense<0.000000e+00> : vector<256x256xf32>
    %3 = tpu.matmul %1, %2, %cst {dimension_numbers = #tpu.dot_dimension_numbers<[1], [0], [0], [1], [0, 0, 1, 1], [], []>} : vector<256x512xbf16>, vector<512x256xbf16>, vector<256x256xf32> -> vector<256x256xf32>
    %c256_i32 = arith.constant 256 : i32
    %4 = arith.muli %arg1, %c256_i32 : i32
    %5 = tpu.assume_multiple %4, 128 : i32
    %c0_3 = arith.constant 0 : index
    %6 = arith.index_cast %5 : i32 to index
    %7 = vector.load %arg2[%c0_3, %6] : memref<256x512xf32, #tpu.memory_space<vmem>>, vector<256x256xf32>
    %c0_4 = arith.constant 0 : index
    %c0_5 = arith.constant 0 : index
    %8 = vector.load %arg4[%c0_4, %c0_5] : memref<1x256xf32, #tpu.memory_space<vmem>>, vector<1x256xf32>
    %9 = vector.broadcast %8 : vector<1x256xf32> to vector<256x256xf32>
    %10 = arith.addf %3, %9 : vector<256x256xf32>
    %11 = arith.addf %10, %7 : vector<256x256xf32>
    %c0_6 = arith.constant 0 : index
    %c0_7 = arith.constant 0 : index
    %12 = vector.load %arg5[%c0_6, %c0_7] : memref<256x256xf32, #tpu.memory_space<vmem>>, vector<256x256xf32>
    tpu.vector_store %arg5[%c0_6, %c0_7], %11 {strides = array<i32>} : memref<256x256xf32, #tpu.memory_space<vmem>>, vector<256x256xf32>,
    return
  }
  func.func @transform_0(%arg0: i32, %arg1: i32) -> (i32, i32) {
    %c0_i32 = arith.constant 0 : i32
    %c0_i32_0 = arith.constant 0 : i32
    return %arg0, %c0_i32 : i32, i32
  }
  func.func @transform_1(%arg0: i32, %arg1: i32) -> (i32, i32) {
    %c0_i32 = arith.constant 0 : i32
    %c0_i32_0 = arith.constant 0 : i32
    return %c0_i32, %arg1 : i32, i32
  }
  func.func @transform_2(%arg0: i32, %arg1: i32) -> (i32, i32) {
    %c0_i32 = arith.constant 0 : i32
    %c0_i32_0 = arith.constant 0 : i32
    return %c0_i32, %arg1 : i32, i32
  }
  func.func @transform_3(%arg0: i32, %arg1: i32) -> (i32, i32) {
    %c0_i32 = arith.constant 0 : i32
    return %arg0, %arg1 : i32, i32
  }
}

</mosaic_0001>

<llo_original>
// kernel: tpu_custom_call.1
$region0: #{tpu_custom_call.1}
  #allocation0 [shape = 'u32[]', space=smem, size = 0x4, offset = 0x4, fixed_abs, tag = 'smem constant byte address 0x4 - core index']
  #allocation1 [shape = 'u32[144,128]{1,0:T(1,128)}', space=vmem, size = 0x12000, scoped, tag = 'internal scratch']
  %s0 = inlined_call_operand.hbm [shape: f32[512,512], index: 0, kind: input, shape index: {}]
  %s1 = inlined_call_operand.hbm [shape: bf16[512,512], index: 1, kind: input, shape index: {}]
  %s2 = inlined_call_operand.vmem [shape: f32[1,512], index: 2, kind: input, shape index: {}]
  %s3 = inlined_call_operand.hbm [shape: f32[512,512], index: 3, kind: output, shape index: {}]
  %s4 = sld [smem:[#allocation0]]
  $region53: #{tpu_custom_call.1} parent=0
    _
  %s6 = ssub.s32 1, %s4
  %s7 = scalar_select 0, %s6, %s4
  $region1: #{tpu_custom_call.1} parent=0
    #allocation2 [shape = 'u8[1048576]{0}', space=vmem, size = 0x100000, scoped, tag = 'input window, operand 0']
    #allocation3 [shape = 's32[2]{0}', space=sflag, size = 0x8, scoped, tag = 'scoped memory for tpu_custom_call.1']
    #allocation4 [shape = 's32[2]{0}', space=sflag, size = 0x8, scoped, tag = 'scoped memory for tpu_custom_call.1']
    #allocation5 [shape = 'u8[524288]{0}', space=vmem, size = 0x80000, scoped, tag = 'input window, operand 1']
    #allocation6 [shape = 's32[2]{0}', space=sflag, size = 0x8, scoped, tag = 'scoped memory for tpu_custom_call.1']
    #allocation7 [shape = 'u8[524288]{0}', space=vmem, size = 0x80000, scoped, tag = 'output window, operand 0']
    %8 = vsyncpa [#allocation3], 0
    %s9 = scalar_lea.sflag [#allocation3], 1
    %10 = vsyncpa %s9, 0
    %11 = vsyncpa [#allocation6], 0
    %s12 = scalar_lea.sflag [#allocation6], 1
    %13 = vsyncpa %s12, 0
    %14 = vsyncpa [#allocation4], 0
    %s15 = scalar_lea.sflag [#allocation4], 1
    %16 = vsyncpa %s15, 0
    loop: start=0, step=1, limit=6
    $region2: #{tpu_custom_call.1} parent=1 // loop_pre_header
      _
    $region3: #{tpu_custom_call.1} parent=1 // loop_header
      %s18 = sphi 0, %s22
      %p19 = scmp.ge.s32.totalorder %s18, 6
      %s25 = sphi 0, %s37
      %s26 = sphi 0, %s33
      %s27 = sphi 0, %s25
      %s28 = sphi 0, %s26
      %s29 = sphi 0, %s27
      %s30 = sphi 0, %s28
      %s40 = sphi 0, %s42
      %s43 = sphi 0, %s40
      %s44 = sphi 0, %s43
      %s60 = sphi 0, %s44
      %s66 = sphi 0, %s68
      %s69 = sphi 0, %s66
      %s70 = sphi 0, %s69
      %s86 = sphi 0, %s70
      %s92 = sphi 0, %s94
      %s95 = sphi 0, %s92
      %s96 = sphi 0, %s95
      %s112 = sphi 0, %s96
      %s120 = sphi 0, %s122
      %s123 = sphi 0, %s120
      %s124 = sphi 0, %s123
      %s140 = sphi 0, %s124
    $region4: #{tpu_custom_call.1} parent=1 // loop_header_branch
      %21 = sbr.rel (%p19) target = $region8
    $region5: #{tpu_custom_call.1} parent=1 // loop_body
      %s23 = ssub.s32 %s18, 1
      %s24 = ssub.s32 %s18, 2
      %s31 = sadd.s32 1, %s26
      %p32 = scmp.ge.s32.totalorder %s31, 2
      %s33 = scalar_select %p32, 0, %s31
      %s34 = sadd.s32 1, %s25
      %s35 = scalar_select %p32, %s34, %s25
      %p36 = scmp.ge.s32.totalorder %s35, 2
      %s37 = scalar_select %p36, 0, %s35
      %s38 = ssub.s32 %s25, %s37
      %p39 = scmp.eq.s32.totalorder %s38, 0
      %s41 = sadd.s32 %s40, 1
      %s42 = scalar_select %p39, %s40, %s41
      %p45 = pneg %p39
      %p46 = scmp.eq.s32.totalorder %s18, 3
      %p47 = por %p45, %p46
      %p48 = scmp.ne.s32.totalorder %s40, %s43
      %p49 = scmp.eq.s32.totalorder %s18, 0
      %p50 = por %p48, %p49
      %p51 = scmp.ne.s32.totalorder %s40, %s43
      %p52 = scmp.eq.s32.totalorder %s23, 3
      %p53 = por %p51, %p52
      %p54 = scmp.ne.s32.totalorder %s43, %s44
      %p55 = scmp.eq.s32.totalorder %s23, 0
      %p56 = por %p54, %p55
      %p57 = scmp.ne.s32.totalorder %s43, %s44
      %p58 = scmp.eq.s32.totalorder %s24, 3
      %p59 = por %p57, %p58
      %p61 = scmp.ne.s32.totalorder %s44, %s60
      %p62 = scmp.eq.s32.totalorder %s24, 0
      %p63 = por %p61, %p62
      %s64 = ssub.s32 %s26, %s33
      %p65 = scmp.eq.s32.totalorder %s64, 0
      %s67 = sadd.s32 %s66, 1
      %s68 = scalar_select %p65, %s66, %s67
      %p71 = pneg %p65
      %p72 = scmp.eq.s32.totalorder %s18, 3
      %p73 = por %p71, %p72
      %p74 = scmp.ne.s32.totalorder %s66, %s69
      %p75 = scmp.eq.s32.totalorder %s18, 0
      %p76 = por %p74, %p75
      %p77 = scmp.ne.s32.totalorder %s66, %s69
      %p78 = scmp.eq.s32.totalorder %s23, 3
      %p79 = por %p77, %p78
      %p80 = scmp.ne.s32.totalorder %s69, %s70
      %p81 = scmp.eq.s32.totalorder %s23, 0
      %p82 = por %p80, %p81
      %p83 = scmp.ne.s32.totalorder %s69, %s70
      %p84 = scmp.eq.s32.totalorder %s24, 3
      %p85 = por %p83, %p84
      %p87 = scmp.ne.s32.totalorder %s70, %s86
      %p88 = scmp.eq.s32.totalorder %s24, 0
      %p89 = por %p87, %p88
      %s90 = ssub.s32 %s26, %s33
      %p91 = scmp.eq.s32.totalorder %s90, 0
      %s93 = sadd.s32 %s92, 1
      %s94 = scalar_select %p91, %s92, %s93
      %p97 = pneg %p91
      %p98 = scmp.eq.s32.totalorder %s18, 3
      %p99 = por %p97, %p98
      %p100 = scmp.ne.s32.totalorder %s92, %s95
      %p101 = scmp.eq.s32.totalorder %s18, 0
      %p102 = por %p100, %p101
      %p103 = scmp.ne.s32.totalorder %s92, %s95
      %p104 = scmp.eq.s32.totalorder %s23, 3
      %p105 = por %p103, %p104
      %p106 = scmp.ne.s32.totalorder %s95, %s96
      %p107 = scmp.eq.s32.totalorder %s23, 0
      %p108 = por %p106, %p107
      %p109 = scmp.ne.s32.totalorder %s95, %s96
      %p110 = scmp.eq.s32.totalorder %s24, 3
      %p111 = por %p109, %p110
      %p113 = scmp.ne.s32.totalorder %s96, %s112
      %p114 = scmp.eq.s32.totalorder %s24, 0
      %p115 = por %p113, %p114
      %s116 = ssub.s32 %s25, %s37
      %s117 = ssub.s32 %s26, %s33
      %s118 = sor.u32 %s116, %s117
      %p119 = scmp.eq.s32.totalorder %s118, 0
      %s121 = sadd.s32 %s120, 1
      %s122 = scalar_select %p119, %s120, %s121
      %p125 = pneg %p119
      %p126 = scmp.eq.s32.totalorder %s18, 3
      %p127 = por %p125, %p126
      %p128 = scmp.ne.s32.totalorder %s120, %s123
      %p129 = scmp.eq.s32.totalorder %s18, 0
      %p130 = por %p128, %p129
      %p131 = scmp.ne.s32.totalorder %s120, %s123
      %p132 = scmp.eq.s32.totalorder %s23, 3
      %p133 = por %p131, %p132
      %p134 = scmp.ne.s32.totalorder %s123, %s124
      %p135 = scmp.eq.s32.totalorder %s23, 0
      %p136 = por %p134, %p135
      %p137 = scmp.ne.s32.totalorder %s123, %s124
      %p138 = scmp.eq.s32.totalorder %s24, 3
      %p139 = por %p137, %p138
      %p141 = scmp.ne.s32.totalorder %s124, %s140
      %p142 = scmp.eq.s32.totalorder %s24, 0
      %p143 = por %p141, %p142
      %p144 = scmp.le.s32.totalorder 1, %s18
      %p145 = scmp.lt.s32.totalorder %s18, 5
      %p146 = pnand %p144, %p145
      %p147 = pneg %p146
      // Predicated region
      $region9: #{tpu_custom_call.1} parent=5 // pred_check
        _
      $region10: #{tpu_custom_call.1} parent=5 // pred_check_branch
        %149 = sbr.rel (%p146) target = $region12
      $region11: #{tpu_custom_call.1} parent=5 // pred_region
        %s150 = ssub.s32 %s18, 1
      $region12: #{tpu_custom_call.1} parent=5 // pred_fallthru
        _
      %p151 = scmp.lt.s32.totalorder %s18, 4
      // Predicated region
      $region13: #{tpu_custom_call.1} parent=5 // pred_check
        %p152 = pneg %p151
      $region14: #{tpu_custom_call.1} parent=5 // pred_check_branch
        %154 = sbr.rel (%p152) target = $region16
      $region15: #{tpu_custom_call.1} parent=5 // pred_region
        // Predicated region
        $region17: #{tpu_custom_call.1} parent=15 // pred_check
          %p155 = pneg %p50
        $region18: #{tpu_custom_call.1} parent=15 // pred_check_branch
          %157 = sbr.rel (%p155) target = $region20
        $region19: #{tpu_custom_call.1} parent=15 // pred_region
          %s158 = sand.u32 %s40, 1
          %s159 = scalar_lea.sflag [#allocation3], %s158
          %s160 = sand.u32 %s40, 1
          %s161 = smul.addr %s160, 1024
          %s162 = scalar_lea.vmem [#allocation2], %s161
          %s163 = smul.u32 32, %s25
          %s165 = ssub.s32 16384, 16384
          %166 = vsyncadd %s159, %s165
          %s167 = smul.addr %s163, 4
          %s168 = smul.addr %s167, 128
          %s169 = scalar_lea.hbm %s0, %s168
          %s170 = sshll.u32 %s162, 4
          %s171 = int_to_ptr.vmem [resolvable:$true] %s170
          %176 = dma.hbm_to_vmem [thread:$0]  %s169, 16384, %s171, %s159, 512, 512, 32
        $region20: #{tpu_custom_call.1} parent=15 // pred_fallthru
          _
        // Predicated region
        $region21: #{tpu_custom_call.1} parent=15 // pred_check
          %p177 = pneg %p76
        $region22: #{tpu_custom_call.1} parent=15 // pred_check_branch
          %179 = sbr.rel (%p177) target = $region24
        $region23: #{tpu_custom_call.1} parent=15 // pred_region
          %s180 = sand.u32 %s66, 1
          %s181 = scalar_lea.sflag [#allocation6], %s180
          %s182 = sand.u32 %s66, 1
          %s183 = smul.addr %s182, 512
          %s184 = scalar_lea.vmem [#allocation5], %s183
          %s185 = smul.u32 2, %s26
          %s187 = ssub.s32 8192, 8192
          %188 = vsyncadd %s181, %s187
          %s189 = smul.addr %s185, 64
          %s190 = scalar_lea.hbm %s1, %s189
          %s191 = sshll.u32 %s184, 4
          %s192 = int_to_ptr.vmem [resolvable:$true] %s191
          %197 = dma.hbm_to_vmem [thread:$0]  %s190, 8192, %s192, %s181, 256, 128, 8
        $region24: #{tpu_custom_call.1} parent=15 // pred_fallthru
          _
        // Predicated region
        $region25: #{tpu_custom_call.1} parent=15 // pred_check
          %p198 = pneg %p102
        $region26: #{tpu_custom_call.1} parent=15 // pred_check_branch
          %200 = sbr.rel (%p198) target = $region28
        $region27: #{tpu_custom_call.1} parent=15 // pred_region
          %s201 = smul.u32 2, %s26
          %p202 = scmp.lt.s32.totalorder %s201, 3
          %s203 = scalar_select %p202, %s201, 3
          %s204 = scalar_lea.vmem %s2, %s203
          %s205 = smul.u32 2, %s26
        $region28: #{tpu_custom_call.1} parent=15 // pred_fallthru
          _
      $region16: #{tpu_custom_call.1} parent=5 // pred_fallthru
        _
      %p206 = scmp.le.s32.totalorder 1, %s18
      %p207 = scmp.lt.s32.totalorder %s18, 5
      %p208 = pnand %p206, %p207
      %p209 = pneg %p208
      // Predicated region
      $region29: #{tpu_custom_call.1} parent=5 // pred_check
        _
      $region30: #{tpu_custom_call.1} parent=5 // pred_check_branch
        %211 = sbr.rel (%p208) target = $region32
      $region31: #{tpu_custom_call.1} parent=5 // pred_region
        %s212 = ssub.s32 %s18, 1
        %s213 = sand.u32 %s43, 1
        %s214 = scalar_lea.sflag [#allocation3], %s213
        %s215 = sand.u32 %s43, 1
        %s216 = smul.addr %s215, 1024
        %s217 = scalar_lea.vmem [#allocation2], %s216
        // Predicated region
        $region33: #{tpu_custom_call.1} parent=31 // pred_check
          %p218 = pneg %p56
        $region34: #{tpu_custom_call.1} parent=31 // pred_check_branch
          %220 = sbr.rel (%p218) target = $region36
        $region35: #{tpu_custom_call.1} parent=31 // pred_region
          %221 = dma.done %s214, 16384
        $region36: #{tpu_custom_call.1} parent=31 // pred_fallthru
          _
        %s222 = sand.u32 %s69, 1
        %s223 = scalar_lea.sflag [#allocation6], %s222
        %s224 = sand.u32 %s69, 1
        %s225 = smul.addr %s224, 512
        %s226 = scalar_lea.vmem [#allocation5], %s225
        // Predicated region
        $region37: #{tpu_custom_call.1} parent=31 // pred_check
          %p227 = pneg %p82
        $region38: #{tpu_custom_call.1} parent=31 // pred_check_branch
          %229 = sbr.rel (%p227) target = $region40
        $region39: #{tpu_custom_call.1} parent=31 // pred_region
          %230 = dma.done %s223, 8192
        $region40: #{tpu_custom_call.1} parent=31 // pred_fallthru
          _
        %s231 = sand.u32 %s43, 1
        %s232 = scalar_lea.sflag [#allocation3], %s231
        %s233 = sand.u32 %s43, 1
        %s234 = smul.addr %s233, 1024
        %s235 = scalar_lea.vmem [#allocation2], %s234
        %p236 = pneg %p56
        %p237 = pneg %p53
        %s238 = sand.u32 %s69, 1
        %s239 = scalar_lea.sflag [#allocation6], %s238
        %s240 = sand.u32 %s69, 1
        %s241 = smul.addr %s240, 512
        %s242 = scalar_lea.vmem [#allocation5], %s241
        %p243 = pneg %p82
        %p244 = pneg %p79
        %s245 = smul.u32 2, %s28
        %p246 = scmp.lt.s32.totalorder %s245, 3
        %s247 = scalar_select %p246, %s245, 3
        %s248 = scalar_lea.vmem %s2, %s247
        %p249 = pneg %p108
        %p250 = pneg %p105
        %p251 = pneg %p136
        %p252 = pneg %p133
        %s253 = sand.u32 %s123, 1
        %s254 = scalar_lea.sflag [#allocation4], %s253
        %s255 = sand.u32 %s123, 1
        %s256 = smul.addr %s255, 512
        %s257 = scalar_lea.vmem [#allocation7], %s256
        %s258 = smul.u32 32, %s27
        %s259 = smul.u32 2, %s28
        %s260 = smul.u32 2, %s28
        %p261 = scmp.lt.s32.totalorder %s260, 3
        %s262 = scalar_select %p261, %s260, 3
        %s263 = scalar_lea.vmem %s2, %s262
        %s264 = smul.u32 2, %s28
        %s265 = smul.u32 32, %s27
        %s266 = smul.u32 2, %s28
        %v267 = vld [vmem:[%s217] sm:$0xff]
        %v268 = vld [vmem:[%s217 + $0x8] sm:$0xff]
        %v269 = vld [vmem:[%s217 + $0x10] sm:$0xff]
        %v270 = vld [vmem:[%s217 + $0x18] sm:$0xff]
        %v271 = vld [vmem:[%s217 + $0x20] sm:$0xff]
        %v272 = vld [vmem:[%s217 + $0x28] sm:$0xff]
        %v273 = vld [vmem:[%s217 + $0x30] sm:$0xff]
        %v274 = vld [vmem:[%s217 + $0x38] sm:$0xff]
        %v275 = vld [vmem:[%s217 + $0x40] sm:$0xff]
        %v276 = vld [vmem:[%s217 + $0x48] sm:$0xff]
        %v277 = vld [vmem:[%s217 + $0x50] sm:$0xff]
        %v278 = vld [vmem:[%s217 + $0x58] sm:$0xff]
        %v279 = vld [vmem:[%s217 + $0x60] sm:$0xff]
        %v280 = vld [vmem:[%s217 + $0x68] sm:$0xff]
        %v281 = vld [vmem:[%s217 + $0x70] sm:$0xff]
        %v282 = vld [vmem:[%s217 + $0x78] sm:$0xff]
        %v283 = vld [vmem:[%s217 + $0x80] sm:$0xff]
        %v284 = vld [vmem:[%s217 + $0x88] sm:$0xff]
        %v285 = vld [vmem:[%s217 + $0x90] sm:$0xff]
        %v286 = vld [vmem:[%s217 + $0x98] sm:$0xff]
        %v287 = vld [vmem:[%s217 + $0xa0] sm:$0xff]
        %v288 = vld [vmem:[%s217 + $0xa8] sm:$0xff]
        %v289 = vld [vmem:[%s217 + $0xb0] sm:$0xff]
        %v290 = vld [vmem:[%s217 + $0xb8] sm:$0xff]
        %v291 = vld [vmem:[%s217 + $0xc0] sm:$0xff]
        %v292 = vld [vmem:[%s217 + $0xc8] sm:$0xff]
        %v293 = vld [vmem:[%s217 + $0xd0] sm:$0xff]
        %v294 = vld [vmem:[%s217 + $0xd8] sm:$0xff]
        %v295 = vld [vmem:[%s217 + $0xe0] sm:$0xff]
        %v296 = vld [vmem:[%s217 + $0xe8] sm:$0xff]
        %v297 = vld [vmem:[%s217 + $0xf0] sm:$0xff]
        %v298 = vld [vmem:[%s217 + $0xf8] sm:$0xff]
        %v299 = vld [vmem:[%s217 + $0x100] sm:$0xff]
        %v300 = vld [vmem:[%s217 + $0x108] sm:$0xff]
        %v301 = vld [vmem:[%s217 + $0x110] sm:$0xff]
        %v302 = vld [vmem:[%s217 + $0x118] sm:$0xff]
        %v303 = vld [vmem:[%s217 + $0x120] sm:$0xff]
        %v304 = vld [vmem:[%s217 + $0x128] sm:$0xff]
        %v305 = vld [vmem:[%s217 + $0x130] sm:$0xff]
        %v306 = vld [vmem:[%s217 + $0x138] sm:$0xff]
        %v307 = vld [vmem:[%s217 + $0x140] sm:$0xff]
        %v308 = vld [vmem:[%s217 + $0x148] sm:$0xff]
        %v309 = vld [vmem:[%s217 + $0x150] sm:$0xff]
        %v310 = vld [vmem:[%s217 + $0x158] sm:$0xff]
        %v311 = vld [vmem:[%s217 + $0x160] sm:$0xff]
        %v312 = vld [vmem:[%s217 + $0x168] sm:$0xff]
        %v313 = vld [vmem:[%s217 + $0x170] sm:$0xff]
        %v314 = vld [vmem:[%s217 + $0x178] sm:$0xff]
        %v315 = vld [vmem:[%s217 + $0x180] sm:$0xff]
        %v316 = vld [vmem:[%s217 + $0x188] sm:$0xff]
        %v317 = vld [vmem:[%s217 + $0x190] sm:$0xff]
        %v318 = vld [vmem:[%s217 + $0x198] sm:$0xff]
        %v319 = vld [vmem:[%s217 + $0x1a0] sm:$0xff]
        %v320 = vld [vmem:[%s217 + $0x1a8] sm:$0xff]
        %v321 = vld [vmem:[%s217 + $0x1b0] sm:$0xff]
        %v322 = vld [vmem:[%s217 + $0x1b8] sm:$0xff]
        %v323 = vld [vmem:[%s217 + $0x1c0] sm:$0xff]
        %v324 = vld [vmem:[%s217 + $0x1c8] sm:$0xff]
        %v325 = vld [vmem:[%s217 + $0x1d0] sm:$0xff]
        %v326 = vld [vmem:[%s217 + $0x1d8] sm:$0xff]
        %v327 = vld [vmem:[%s217 + $0x1e0] sm:$0xff]
        %v328 = vld [vmem:[%s217 + $0x1e8] sm:$0xff]
        %v329 = vld [vmem:[%s217 + $0x1f0] sm:$0xff]
        %v330 = vld [vmem:[%s217 + $0x1f8] sm:$0xff]
        %v331 = vld [vmem:[%s217 + $0x200] sm:$0xff]
        %v332 = vld [vmem:[%s217 + $0x208] sm:$0xff]
        %v333 = vld [vmem:[%s217 + $0x210] sm:$0xff]
        %v334 = vld [vmem:[%s217 + $0x218] sm:$0xff]
        %v335 = vld [vmem:[%s217 + $0x220] sm:$0xff]
        %v336 = vld [vmem:[%s217 + $0x228] sm:$0xff]
        %v337 = vld [vmem:[%s217 + $0x230] sm:$0xff]
        %v338 = vld [vmem:[%s217 + $0x238] sm:$0xff]
        %v339 = vld [vmem:[%s217 + $0x240] sm:$0xff]
        %v340 = vld [vmem:[%s217 + $0x248] sm:$0xff]
        %v341 = vld [vmem:[%s217 + $0x250] sm:$0xff]
        %v342 = vld [vmem:[%s217 + $0x258] sm:$0xff]
        %v343 = vld [vmem:[%s217 + $0x260] sm:$0xff]
        %v344 = vld [vmem:[%s217 + $0x268] sm:$0xff]
        %v345 = vld [vmem:[%s217 + $0x270] sm:$0xff]
        %v346 = vld [vmem:[%s217 + $0x278] sm:$0xff]
        %v347 = vld [vmem:[%s217 + $0x280] sm:$0xff]
        %v348 = vld [vmem:[%s217 + $0x288] sm:$0xff]
        %v349 = vld [vmem:[%s217 + $0x290] sm:$0xff]
        %v350 = vld [vmem:[%s217 + $0x298] sm:$0xff]
        %v351 = vld [vmem:[%s217 + $0x2a0] sm:$0xff]
        %v352 = vld [vmem:[%s217 + $0x2a8] sm:$0xff]
        %v353 = vld [vmem:[%s217 + $0x2b0] sm:$0xff]
        %v354 = vld [vmem:[%s217 + $0x2b8] sm:$0xff]
        %v355 = vld [vmem:[%s217 + $0x2c0] sm:$0xff]
        %v356 = vld [vmem:[%s217 + $0x2c8] sm:$0xff]
        %v357 = vld [vmem:[%s217 + $0x2d0] sm:$0xff]
        %v358 = vld [vmem:[%s217 + $0x2d8] sm:$0xff]
        %v359 = vld [vmem:[%s217 + $0x2e0] sm:$0xff]
        %v360 = vld [vmem:[%s217 + $0x2e8] sm:$0xff]
        %v361 = vld [vmem:[%s217 + $0x2f0] sm:$0xff]
        %v362 = vld [vmem:[%s217 + $0x2f8] sm:$0xff]
        %v363 = vld [vmem:[%s217 + $0x300] sm:$0xff]
        %v364 = vld [vmem:[%s217 + $0x308] sm:$0xff]
        %v365 = vld [vmem:[%s217 + $0x310] sm:$0xff]
        %v366 = vld [vmem:[%s217 + $0x318] sm:$0xff]
        %v367 = vld [vmem:[%s217 + $0x320] sm:$0xff]
        %v368 = vld [vmem:[%s217 + $0x328] sm:$0xff]
        %v369 = vld [vmem:[%s217 + $0x330] sm:$0xff]
        %v370 = vld [vmem:[%s217 + $0x338] sm:$0xff]
        %v371 = vld [vmem:[%s217 + $0x340] sm:$0xff]
        %v372 = vld [vmem:[%s217 + $0x348] sm:$0xff]
        %v373 = vld [vmem:[%s217 + $0x350] sm:$0xff]
        %v374 = vld [vmem:[%s217 + $0x358] sm:$0xff]
        %v375 = vld [vmem:[%s217 + $0x360] sm:$0xff]
        %v376 = vld [vmem:[%s217 + $0x368] sm:$0xff]
        %v377 = vld [vmem:[%s217 + $0x370] sm:$0xff]
        %v378 = vld [vmem:[%s217 + $0x378] sm:$0xff]
        %v379 = vld [vmem:[%s217 + $0x380] sm:$0xff]
        %v380 = vld [vmem:[%s217 + $0x388] sm:$0xff]
        %v381 = vld [vmem:[%s217 + $0x390] sm:$0xff]
        %v382 = vld [vmem:[%s217 + $0x398] sm:$0xff]
        %v383 = vld [vmem:[%s217 + $0x3a0] sm:$0xff]
        %v384 = vld [vmem:[%s217 + $0x3a8] sm:$0xff]
        %v385 = vld [vmem:[%s217 + $0x3b0] sm:$0xff]
        %v386 = vld [vmem:[%s217 + $0x3b8] sm:$0xff]
        %v387 = vld [vmem:[%s217 + $0x3c0] sm:$0xff]
        %v388 = vld [vmem:[%s217 + $0x3c8] sm:$0xff]
        %v389 = vld [vmem:[%s217 + $0x3d0] sm:$0xff]
        %v390 = vld [vmem:[%s217 + $0x3d8] sm:$0xff]
        %v391 = vld [vmem:[%s217 + $0x3e0] sm:$0xff]
        %v392 = vld [vmem:[%s217 + $0x3e8] sm:$0xff]
        %v393 = vld [vmem:[%s217 + $0x3f0] sm:$0xff]
        %v394 = vld [vmem:[%s217 + $0x3f8] sm:$0xff]
        %v395 = vpack.c.bf16 %v271, %v267
        %v396 = vpack.c.bf16 %v272, %v268
        %v397 = vpack.c.bf16 %v273, %v269
        %v398 = vpack.c.bf16 %v274, %v270
        %v399 = vpack.c.bf16 %v279, %v275
        %v400 = vpack.c.bf16 %v280, %v276
        %v401 = vpack.c.bf16 %v281, %v277
        %v402 = vpack.c.bf16 %v282, %v278
        %v403 = vpack.c.bf16 %v287, %v283
        %v404 = vpack.c.bf16 %v288, %v284
        %v405 = vpack.c.bf16 %v289, %v285
        %v406 = vpack.c.bf16 %v290, %v286
        %v407 = vpack.c.bf16 %v295, %v291
        %v408 = vpack.c.bf16 %v296, %v292
        %v409 = vpack.c.bf16 %v297, %v293
        %v410 = vpack.c.bf16 %v298, %v294
        %v411 = vpack.c.bf16 %v303, %v299
        %v412 = vpack.c.bf16 %v304, %v300
        %v413 = vpack.c.bf16 %v305, %v301
        %v414 = vpack.c.bf16 %v306, %v302
        %v415 = vpack.c.bf16 %v311, %v307
        %v416 = vpack.c.bf16 %v312, %v308
        %v417 = vpack.c.bf16 %v313, %v309
        %v418 = vpack.c.bf16 %v314, %v310
        %v419 = vpack.c.bf16 %v319, %v315
        %v420 = vpack.c.bf16 %v320, %v316
        %v421 = vpack.c.bf16 %v321, %v317
        %v422 = vpack.c.bf16 %v322, %v318
        %v423 = vpack.c.bf16 %v327, %v323
        %v424 = vpack.c.bf16 %v328, %v324
        %v425 = vpack.c.bf16 %v329, %v325
        %v426 = vpack.c.bf16 %v330, %v326
        %v427 = vpack.c.bf16 %v335, %v331
        %v428 = vpack.c.bf16 %v336, %v332
        %v429 = vpack.c.bf16 %v337, %v333
        %v430 = vpack.c.bf16 %v338, %v334
        %v431 = vpack.c.bf16 %v343, %v339
        %v432 = vpack.c.bf16 %v344, %v340
        %v433 = vpack.c.bf16 %v345, %v341
        %v434 = vpack.c.bf16 %v346, %v342
        %v435 = vpack.c.bf16 %v351, %v347
        %v436 = vpack.c.bf16 %v352, %v348
        %v437 = vpack.c.bf16 %v353, %v349
        %v438 = vpack.c.bf16 %v354, %v350
        %v439 = vpack.c.bf16 %v359, %v355
        %v440 = vpack.c.bf16 %v360, %v356
        %v441 = vpack.c.bf16 %v361, %v357
        %v442 = vpack.c.bf16 %v362, %v358
        %v443 = vpack.c.bf16 %v367, %v363
        %v444 = vpack.c.bf16 %v368, %v364
        %v445 = vpack.c.bf16 %v369, %v365
        %v446 = vpack.c.bf16 %v370, %v366
        %v447 = vpack.c.bf16 %v375, %v371
        %v448 = vpack.c.bf16 %v376, %v372
        %v449 = vpack.c.bf16 %v377, %v373
        %v450 = vpack.c.bf16 %v378, %v374
        %v451 = vpack.c.bf16 %v383, %v379
        %v452 = vpack.c.bf16 %v384, %v380
        %v453 = vpack.c.bf16 %v385, %v381
        %v454 = vpack.c.bf16 %v386, %v382
        %v455 = vpack.c.bf16 %v391, %v387
        %v456 = vpack.c.bf16 %v392, %v388
        %v457 = vpack.c.bf16 %v393, %v389
        %v458 = vpack.c.bf16 %v394, %v390
        %v459 = vld [vmem:[%s226] sm:$0xff]
        %v460 = vld [vmem:[%s226 + $0x8] sm:$0xff]
        %v461 = vld [vmem:[%s226 + $0x10] sm:$0xff]
        %v462 = vld [vmem:[%s226 + $0x18] sm:$0xff]
        %v463 = vld [vmem:[%s226 + $0x20] sm:$0xff]
        %v464 = vld [vmem:[%s226 + $0x28] sm:$0xff]
        %v465 = vld [vmem:[%s226 + $0x30] sm:$0xff]
        %v466 = vld [vmem:[%s226 + $0x38] sm:$0xff]
        %v467 = vld [vmem:[%s226 + $0x40] sm:$0xff]
        %v468 = vld [vmem:[%s226 + $0x48] sm:$0xff]
        %v469 = vld [vmem:[%s226 + $0x50] sm:$0xff]
        %v470 = vld [vmem:[%s226 + $0x58] sm:$0xff]
        %v471 = vld [vmem:[%s226 + $0x60] sm:$0xff]
        %v472 = vld [vmem:[%s226 + $0x68] sm:$0xff]
        %v473 = vld [vmem:[%s226 + $0x70] sm:$0xff]
        %v474 = vld [vmem:[%s226 + $0x78] sm:$0xff]
        %v475 = vld [vmem:[%s226 + $0x80] sm:$0xff]
        %v476 = vld [vmem:[%s226 + $0x88] sm:$0xff]
        %v477 = vld [vmem:[%s226 + $0x90] sm:$0xff]
        %v478 = vld [vmem:[%s226 + $0x98] sm:$0xff]
        %v479 = vld [vmem:[%s226 + $0xa0] sm:$0xff]
        %v480 = vld [vmem:[%s226 + $0xa8] sm:$0xff]
        %v481 = vld [vmem:[%s226 + $0xb0] sm:$0xff]
        %v482 = vld [vmem:[%s226 + $0xb8] sm:$0xff]
        %v483 = vld [vmem:[%s226 + $0xc0] sm:$0xff]
        %v484 = vld [vmem:[%s226 + $0xc8] sm:$0xff]
        %v485 = vld [vmem:[%s226 + $0xd0] sm:$0xff]
        %v486 = vld [vmem:[%s226 + $0xd8] sm:$0xff]
        %v487 = vld [vmem:[%s226 + $0xe0] sm:$0xff]
        %v488 = vld [vmem:[%s226 + $0xe8] sm:$0xff]
        %v489 = vld [vmem:[%s226 + $0xf0] sm:$0xff]
        %v490 = vld [vmem:[%s226 + $0xf8] sm:$0xff]
        %v491 = vld [vmem:[%s226 + $0x100] sm:$0xff]
        %v492 = vld [vmem:[%s226 + $0x108] sm:$0xff]
        %v493 = vld [vmem:[%s226 + $0x110] sm:$0xff]
        %v494 = vld [vmem:[%s226 + $0x118] sm:$0xff]
        %v495 = vld [vmem:[%s226 + $0x120] sm:$0xff]
        %v496 = vld [vmem:[%s226 + $0x128] sm:$0xff]
        %v497 = vld [vmem:[%s226 + $0x130] sm:$0xff]
        %v498 = vld [vmem:[%s226 + $0x138] sm:$0xff]
        %v499 = vld [vmem:[%s226 + $0x140] sm:$0xff]
        %v500 = vld [vmem:[%s226 + $0x148] sm:$0xff]
        %v501 = vld [vmem:[%s226 + $0x150] sm:$0xff]
        %v502 = vld [vmem:[%s226 + $0x158] sm:$0xff]
        %v503 = vld [vmem:[%s226 + $0x160] sm:$0xff]
        %v504 = vld [vmem:[%s226 + $0x168] sm:$0xff]
        %v505 = vld [vmem:[%s226 + $0x170] sm:$0xff]
        %v506 = vld [vmem:[%s226 + $0x178] sm:$0xff]
        %v507 = vld [vmem:[%s226 + $0x180] sm:$0xff]
        %v508 = vld [vmem:[%s226 + $0x188] sm:$0xff]
        %v509 = vld [vmem:[%s226 + $0x190] sm:$0xff]
        %v510 = vld [vmem:[%s226 + $0x198] sm:$0xff]
        %v511 = vld [vmem:[%s226 + $0x1a0] sm:$0xff]
        %v512 = vld [vmem:[%s226 + $0x1a8] sm:$0xff]
        %v513 = vld [vmem:[%s226 + $0x1b0] sm:$0xff]
        %v514 = vld [vmem:[%s226 + $0x1b8] sm:$0xff]
        %v515 = vld [vmem:[%s226 + $0x1c0] sm:$0xff]
        %v516 = vld [vmem:[%s226 + $0x1c8] sm:$0xff]
        %v517 = vld [vmem:[%s226 + $0x1d0] sm:$0xff]
        %v518 = vld [vmem:[%s226 + $0x1d8] sm:$0xff]
        %v519 = vld [vmem:[%s226 + $0x1e0] sm:$0xff]
        %v520 = vld [vmem:[%s226 + $0x1e8] sm:$0xff]
        %v521 = vld [vmem:[%s226 + $0x1f0] sm:$0xff]
        %v522 = vld [vmem:[%s226 + $0x1f8] sm:$0xff]
        %s523 = smul.u32 %s28, 256
        %s524 = sshra.s32 %s523, 7
        %s525 = sand.u32 %s523, 127
        %s526 = smul.addr %s524, 8
        %s527 = scalar_lea.vmem %s217, %s526 [#allocation2]
        %v528 = vld [vmem:[%s527] sm:$0xff]
        %v529 = vld [vmem:[%s527 + $0x8] sm:$0xff]
        %v530 = vld [vmem:[%s527 + $0x20] sm:$0xff]
        %v531 = vld [vmem:[%s527 + $0x28] sm:$0xff]
        %v532 = vld [vmem:[%s527 + $0x40] sm:$0xff]
        %v533 = vld [vmem:[%s527 + $0x48] sm:$0xff]
        %v534 = vld [vmem:[%s527 + $0x60] sm:$0xff]
        %v535 = vld [vmem:[%s527 + $0x68] sm:$0xff]
        %v536 = vld [vmem:[%s527 + $0x80] sm:$0xff]
        %v537 = vld [vmem:[%s527 + $0x88] sm:$0xff]
        %v538 = vld [vmem:[%s527 + $0xa0] sm:$0xff]
        %v539 = vld [vmem:[%s527 + $0xa8] sm:$0xff]
        %v540 = vld [vmem:[%s527 + $0xc0] sm:$0xff]
        %v541 = vld [vmem:[%s527 + $0xc8] sm:$0xff]
        %v542 = vld [vmem:[%s527 + $0xe0] sm:$0xff]
        %v543 = vld [vmem:[%s527 + $0xe8] sm:$0xff]
        %v544 = vld [vmem:[%s527 + $0x100] sm:$0xff]
        %v545 = vld [vmem:[%s527 + $0x108] sm:$0xff]
        %v546 = vld [vmem:[%s527 + $0x120] sm:$0xff]
        %v547 = vld [vmem:[%s527 + $0x128] sm:$0xff]
        %v548 = vld [vmem:[%s527 + $0x140] sm:$0xff]
        %v549 = vld [vmem:[%s527 + $0x148] sm:$0xff]
        %v550 = vld [vmem:[%s527 + $0x160] sm:$0xff]
        %v551 = vld [vmem:[%s527 + $0x168] sm:$0xff]
        %v552 = vld [vmem:[%s527 + $0x180] sm:$0xff]
        %v553 = vld [vmem:[%s527 + $0x188] sm:$0xff]
        %v554 = vld [vmem:[%s527 + $0x1a0] sm:$0xff]
        %v555 = vld [vmem:[%s527 + $0x1a8] sm:$0xff]
        %v556 = vld [vmem:[%s527 + $0x1c0] sm:$0xff]
        %v557 = vld [vmem:[%s527 + $0x1c8] sm:$0xff]
        %v558 = vld [vmem:[%s527 + $0x1e0] sm:$0xff]
        %v559 = vld [vmem:[%s527 + $0x1e8] sm:$0xff]
        %v560 = vld [vmem:[%s527 + $0x200] sm:$0xff]
        %v561 = vld [vmem:[%s527 + $0x208] sm:$0xff]
        %v562 = vld [vmem:[%s527 + $0x220] sm:$0xff]
        %v563 = vld [vmem:[%s527 + $0x228] sm:$0xff]
        %v564 = vld [vmem:[%s527 + $0x240] sm:$0xff]
        %v565 = vld [vmem:[%s527 + $0x248] sm:$0xff]
        %v566 = vld [vmem:[%s527 + $0x260] sm:$0xff]
        %v567 = vld [vmem:[%s527 + $0x268] sm:$0xff]
        %v568 = vld [vmem:[%s527 + $0x280] sm:$0xff]
        %v569 = vld [vmem:[%s527 + $0x288] sm:$0xff]
        %v570 = vld [vmem:[%s527 + $0x2a0] sm:$0xff]
        %v571 = vld [vmem:[%s527 + $0x2a8] sm:$0xff]
        %v572 = vld [vmem:[%s527 + $0x2c0] sm:$0xff]
        %v573 = vld [vmem:[%s527 + $0x2c8] sm:$0xff]
        %v574 = vld [vmem:[%s527 + $0x2e0] sm:$0xff]
        %v575 = vld [vmem:[%s527 + $0x2e8] sm:$0xff]
        %v576 = vld [vmem:[%s527 + $0x300] sm:$0xff]
        %v577 = vld [vmem:[%s527 + $0x308] sm:$0xff]
        %v578 = vld [vmem:[%s527 + $0x320] sm:$0xff]
        %v579 = vld [vmem:[%s527 + $0x328] sm:$0xff]
        %v580 = vld [vmem:[%s527 + $0x340] sm:$0xff]
        %v581 = vld [vmem:[%s527 + $0x348] sm:$0xff]
        %v582 = vld [vmem:[%s527 + $0x360] sm:$0xff]
        %v583 = vld [vmem:[%s527 + $0x368] sm:$0xff]
        %v584 = vld [vmem:[%s527 + $0x380] sm:$0xff]
        %v585 = vld [vmem:[%s527 + $0x388] sm:$0xff]
        %v586 = vld [vmem:[%s527 + $0x3a0] sm:$0xff]
        %v587 = vld [vmem:[%s527 + $0x3a8] sm:$0xff]
        %v588 = vld [vmem:[%s527 + $0x3c0] sm:$0xff]
        %v589 = vld [vmem:[%s527 + $0x3c8] sm:$0xff]
        %v590 = vld [vmem:[%s527 + $0x3e0] sm:$0xff]
        %v591 = vld [vmem:[%s527 + $0x3e8] sm:$0xff]
        %v592 = vld [vmem:[%s263] sm:$0x3]
        %v594 = vlaneseq
        %v595 = vshrl.u32 %v594, 7
        %v596 = vsub.s32 0, %v595
        %v597 = vrot.slane %v592, %v596
        %v598 = vlaneseq
        %v599 = vshrl.u32 %v598, 7
        %v600 = vsub.s32 1, %v599
        %v601 = vrot.slane %v592, %v600
        %v668 = vunpack.c.l.b16 %v459
        %v669 = vunpack.c.h.b16 %v459
        %v670 = vunpack.c.l.b16 %v460
        %v671 = vunpack.c.h.b16 %v460
        %v672 = vunpack.c.l.b16 %v461
        %v673 = vunpack.c.h.b16 %v461
        %v674 = vunpack.c.l.b16 %v462
        %v675 = vunpack.c.h.b16 %v462
        %v676 = vunpack.c.l.b16 %v463
        %v677 = vunpack.c.h.b16 %v463
        %v678 = vunpack.c.l.b16 %v464
        %v679 = vunpack.c.h.b16 %v464
        %v680 = vunpack.c.l.b16 %v465
        %v681 = vunpack.c.h.b16 %v465
        %v682 = vunpack.c.l.b16 %v466
        %v683 = vunpack.c.h.b16 %v466
        %v684 = vunpack.c.l.b16 %v467
        %v685 = vunpack.c.h.b16 %v467
        %v686 = vunpack.c.l.b16 %v468
        %v687 = vunpack.c.h.b16 %v468
        %v688 = vunpack.c.l.b16 %v469
        %v689 = vunpack.c.h.b16 %v469
        %v690 = vunpack.c.l.b16 %v470
        %v691 = vunpack.c.h.b16 %v470
        %v692 = vunpack.c.l.b16 %v471
        %v693 = vunpack.c.h.b16 %v471
        %v694 = vunpack.c.l.b16 %v472
        %v695 = vunpack.c.h.b16 %v472
        %v696 = vunpack.c.l.b16 %v473
        %v697 = vunpack.c.h.b16 %v473
        %v698 = vunpack.c.l.b16 %v474
        %v699 = vunpack.c.h.b16 %v474
        %v700 = vunpack.c.l.b16 %v475
        %v701 = vunpack.c.h.b16 %v475
        %v702 = vunpack.c.l.b16 %v476
        %v703 = vunpack.c.h.b16 %v476
        %v704 = vunpack.c.l.b16 %v477
        %v705 = vunpack.c.h.b16 %v477
        %v706 = vunpack.c.l.b16 %v478
        %v707 = vunpack.c.h.b16 %v478
        %v708 = vunpack.c.l.b16 %v479
        %v709 = vunpack.c.h.b16 %v479
        %v710 = vunpack.c.l.b16 %v480
        %v711 = vunpack.c.h.b16 %v480
        %v712 = vunpack.c.l.b16 %v481
        %v713 = vunpack.c.h.b16 %v481
        %v714 = vunpack.c.l.b16 %v482
        %v715 = vunpack.c.h.b16 %v482
        %v716 = vunpack.c.l.b16 %v483
        %v717 = vunpack.c.h.b16 %v483
        %v718 = vunpack.c.l.b16 %v484
        %v719 = vunpack.c.h.b16 %v484
        %v720 = vunpack.c.l.b16 %v485
        %v721 = vunpack.c.h.b16 %v485
        %v722 = vunpack.c.l.b16 %v486
        %v723 = vunpack.c.h.b16 %v486
        %v724 = vunpack.c.l.b16 %v487
        %v725 = vunpack.c.h.b16 %v487
        %v726 = vunpack.c.l.b16 %v488
        %v727 = vunpack.c.h.b16 %v488
        %v728 = vunpack.c.l.b16 %v489
        %v729 = vunpack.c.h.b16 %v489
        %v730 = vunpack.c.l.b16 %v490
        %v731 = vunpack.c.h.b16 %v490
        %v732 = vunpack.c.l.b16 %v491
        %v733 = vunpack.c.h.b16 %v491
        %v734 = vunpack.c.l.b16 %v492
        %v735 = vunpack.c.h.b16 %v492
        %v736 = vunpack.c.l.b16 %v493
        %v737 = vunpack.c.h.b16 %v493
        %v738 = vunpack.c.l.b16 %v494
        %v739 = vunpack.c.h.b16 %v494
        %v740 = vunpack.c.l.b16 %v495
        %v741 = vunpack.c.h.b16 %v495
        %v742 = vunpack.c.l.b16 %v496
        %v743 = vunpack.c.h.b16 %v496
        %v744 = vunpack.c.l.b16 %v497
        %v745 = vunpack.c.h.b16 %v497
        %v746 = vunpack.c.l.b16 %v498
        %v747 = vunpack.c.h.b16 %v498
        %v748 = vunpack.c.l.b16 %v499
        %v749 = vunpack.c.h.b16 %v499
        %v750 = vunpack.c.l.b16 %v500
        %v751 = vunpack.c.h.b16 %v500
        %v752 = vunpack.c.l.b16 %v501
        %v753 = vunpack.c.h.b16 %v501
        %v754 = vunpack.c.l.b16 %v502
        %v755 = vunpack.c.h.b16 %v502
        %v756 = vunpack.c.l.b16 %v503
        %v757 = vunpack.c.h.b16 %v503
        %v758 = vunpack.c.l.b16 %v504
        %v759 = vunpack.c.h.b16 %v504
        %v760 = vunpack.c.l.b16 %v505
        %v761 = vunpack.c.h.b16 %v505
        %v762 = vunpack.c.l.b16 %v506
        %v763 = vunpack.c.h.b16 %v506
        %v764 = vunpack.c.l.b16 %v507
        %v765 = vunpack.c.h.b16 %v507
        %v766 = vunpack.c.l.b16 %v508
        %v767 = vunpack.c.h.b16 %v508
        %v768 = vunpack.c.l.b16 %v509
        %v769 = vunpack.c.h.b16 %v509
        %v770 = vunpack.c.l.b16 %v510
        %v771 = vunpack.c.h.b16 %v510
        %v772 = vunpack.c.l.b16 %v511
        %v773 = vunpack.c.h.b16 %v511
        %v774 = vunpack.c.l.b16 %v512
        %v775 = vunpack.c.h.b16 %v512
        %v776 = vunpack.c.l.b16 %v513
        %v777 = vunpack.c.h.b16 %v513
        %v778 = vunpack.c.l.b16 %v514
        %v779 = vunpack.c.h.b16 %v514
        %v780 = vunpack.c.l.b16 %v515
        %v781 = vunpack.c.h.b16 %v515
        %v782 = vunpack.c.l.b16 %v516
        %v783 = vunpack.c.h.b16 %v516
        %v784 = vunpack.c.l.b16 %v517
        %v785 = vunpack.c.h.b16 %v517
        %v786 = vunpack.c.l.b16 %v518
        %v787 = vunpack.c.h.b16 %v518
        %v788 = vunpack.c.l.b16 %v519
        %v789 = vunpack.c.h.b16 %v519
        %v790 = vunpack.c.l.b16 %v520
        %v791 = vunpack.c.h.b16 %v520
        %v792 = vunpack.c.l.b16 %v521
        %v793 = vunpack.c.h.b16 %v521
        %v794 = vunpack.c.l.b16 %v522
        %v795 = vunpack.c.h.b16 %v522
        %v796 = vpack.c.b16 %v670, %v668
        %v797 = vpack.c.b16 %v671, %v669
        %v798 = vpack.c.b16 %v674, %v672
        %v799 = vpack.c.b16 %v675, %v673
        %v800 = vpack.c.b16 %v678, %v676
        %v801 = vpack.c.b16 %v679, %v677
        %v802 = vpack.c.b16 %v682, %v680
        %v803 = vpack.c.b16 %v683, %v681
        %v804 = vpack.c.b16 %v686, %v684
        %v805 = vpack.c.b16 %v687, %v685
        %v806 = vpack.c.b16 %v690, %v688
        %v807 = vpack.c.b16 %v691, %v689
        %v808 = vpack.c.b16 %v694, %v692
        %v809 = vpack.c.b16 %v695, %v693
        %v810 = vpack.c.b16 %v698, %v696
        %v811 = vpack.c.b16 %v699, %v697
        %v812 = vpack.c.b16 %v702, %v700
        %v813 = vpack.c.b16 %v703, %v701
        %v814 = vpack.c.b16 %v706, %v704
        %v815 = vpack.c.b16 %v707, %v705
        %v816 = vpack.c.b16 %v710, %v708
        %v817 = vpack.c.b16 %v711, %v709
        %v818 = vpack.c.b16 %v714, %v712
        %v819 = vpack.c.b16 %v715, %v713
        %v820 = vpack.c.b16 %v718, %v716
        %v821 = vpack.c.b16 %v719, %v717
        %v822 = vpack.c.b16 %v722, %v720
        %v823 = vpack.c.b16 %v723, %v721
        %v824 = vpack.c.b16 %v726, %v724
        %v825 = vpack.c.b16 %v727, %v725
        %v826 = vpack.c.b16 %v730, %v728
        %v827 = vpack.c.b16 %v731, %v729
        %v828 = vpack.c.b16 %v734, %v732
        %v829 = vpack.c.b16 %v735, %v733
        %v830 = vpack.c.b16 %v738, %v736
        %v831 = vpack.c.b16 %v739, %v737
        %v832 = vpack.c.b16 %v742, %v740
        %v833 = vpack.c.b16 %v743, %v741
        %v834 = vpack.c.b16 %v746, %v744
        %v835 = vpack.c.b16 %v747, %v745
        %v836 = vpack.c.b16 %v750, %v748
        %v837 = vpack.c.b16 %v751, %v749
        %v838 = vpack.c.b16 %v754, %v752
        %v839 = vpack.c.b16 %v755, %v753
        %v840 = vpack.c.b16 %v758, %v756
        %v841 = vpack.c.b16 %v759, %v757
        %v842 = vpack.c.b16 %v762, %v760
        %v843 = vpack.c.b16 %v763, %v761
        %v844 = vpack.c.b16 %v766, %v764
        %v845 = vpack.c.b16 %v767, %v765
        %v846 = vpack.c.b16 %v770, %v768
        %v847 = vpack.c.b16 %v771, %v769
        %v848 = vpack.c.b16 %v774, %v772
        %v849 = vpack.c.b16 %v775, %v773
        %v850 = vpack.c.b16 %v778, %v776
        %v851 = vpack.c.b16 %v779, %v777
        %v852 = vpack.c.b16 %v782, %v780
        %v853 = vpack.c.b16 %v783, %v781
        %v854 = vpack.c.b16 %v786, %v784
        %v855 = vpack.c.b16 %v787, %v785
        %v856 = vpack.c.b16 %v790, %v788
        %v857 = vpack.c.b16 %v791, %v789
        %v858 = vpack.c.b16 %v794, %v792
        %v859 = vpack.c.b16 %v795, %v793
        %924 = vmatprep.subr.bf16.mxu0 %v797
        %925 = vmatpush1.bf16.msra.mxu0 %v796
        %926 = vmatprep.subr.bf16.mxu0 %v799
        %927 = vmatpush1.bf16.msra.mxu0 %v798
        %928 = vmatprep.subr.bf16.mxu0 %v801
        %929 = vmatpush1.bf16.msra.mxu0 %v800
        %930 = vmatprep.subr.bf16.mxu0 %v803
        %931 = vmatpush1.bf16.msra.mxu0 %v802
        %932 = vmatprep.subr.bf16.mxu0 %v805
        %933 = vmatpush1.bf16.msra.mxu0 %v804
        %934 = vmatprep.subr.bf16.mxu0 %v807
        %935 = vmatpush1.bf16.msra.mxu0 %v806
        %936 = vmatprep.subr.bf16.mxu0 %v809
        %937 = vmatpush1.bf16.msra.mxu0 %v808
        %938 = vmatprep.subr.bf16.mxu0 %v811
        %939 = vmatpush1.bf16.msra.mxu0 %v810
        %940 = vmatprep.subr.bf16.mxu0 %v813
        %941 = vmatpush1.bf16.msra.mxu0 %v812
        %942 = vmatprep.subr.bf16.mxu0 %v815
        %943 = vmatpush1.bf16.msra.mxu0 %v814
        %944 = vmatprep.subr.bf16.mxu0 %v817
        %945 = vmatpush1.bf16.msra.mxu0 %v816
        %946 = vmatprep.subr.bf16.mxu0 %v819
        %947 = vmatpush1.bf16.msra.mxu0 %v818
        %948 = vmatprep.subr.bf16.mxu0 %v821
        %949 = vmatpush1.bf16.msra.mxu0 %v820
        %950 = vmatprep.subr.bf16.mxu0 %v823
        %951 = vmatpush1.bf16.msra.mxu0 %v822
        %952 = vmatprep.subr.bf16.mxu0 %v825
        %953 = vmatpush1.bf16.msra.mxu0 %v824
        %954 = vmatprep.subr.bf16.mxu0 %v827
        %955 = vmatpush1.bf16.msra.mxu0 %v826
        %956 = vmatprep.mubr.bf16.mxu0 %v396
        %957 = vmatmul.mubr.bf16.gmra.mrb[0].mxu0 %v395
        %v958 = vpop.f32.mrb[0].mxu0
        %v959 = vadd.f32 %v597, %v958
        %v960 = vpop.f32.mrb[0].mxu0
        %v961 = vadd.f32 %v601, %v960
        %v962 = vpop.f32.mrb[0].mxu0
        %v963 = vadd.f32 %v597, %v962
        %v964 = vpop.f32.mrb[0].mxu0
        %v965 = vadd.f32 %v601, %v964
        %966 = vmatprep.mubr.bf16.mxu0 %v400
        %967 = vmatmul.mubr.bf16.gmra.mrb[0].mxu0 %v399
        %v968 = vpop.f32.mrb[0].mxu0
        %v969 = vadd.f32 %v597, %v968
        %v970 = vpop.f32.mrb[0].mxu0
        %v971 = vadd.f32 %v601, %v970
        %v972 = vpop.f32.mrb[0].mxu0
        %v973 = vadd.f32 %v597, %v972
        %v974 = vpop.f32.mrb[0].mxu0
        %v975 = vadd.f32 %v601, %v974
        %976 = vmatprep.mubr.bf16.mxu0 %v404
        %977 = vmatmul.mubr.bf16.gmra.mrb[0].mxu0 %v403
        %v978 = vpop.f32.mrb[0].mxu0
        %v979 = vadd.f32 %v597, %v978
        %v980 = vpop.f32.mrb[0].mxu0
        %v981 = vadd.f32 %v601, %v980
        %v982 = vpop.f32.mrb[0].mxu0
        %v983 = vadd.f32 %v597, %v982
        %v984 = vpop.f32.mrb[0].mxu0
        %v985 = vadd.f32 %v601, %v984
        %986 = vmatprep.mubr.bf16.mxu0 %v408
        %987 = vmatmul.mubr.bf16.gmra.mrb[0].mxu0 %v407
        %v988 = vpop.f32.mrb[0].mxu0
        %v989 = vadd.f32 %v597, %v988
        %v990 = vpop.f32.mrb[0].mxu0
        %v991 = vadd.f32 %v601, %v990
        %v992 = vpop.f32.mrb[0].mxu0
        %v993 = vadd.f32 %v597, %v992
        %v994 = vpop.f32.mrb[0].mxu0
        %v995 = vadd.f32 %v601, %v994
        %996 = vmatprep.mubr.bf16.mxu0 %v412
        %997 = vmatmul.mubr.bf16.gmra.mrb[0].mxu0 %v411
        %v998 = vpop.f32.mrb[0].mxu0
        %v999 = vadd.f32 %v597, %v998
        %v1000 = vpop.f32.mrb[0].mxu0
        %v1001 = vadd.f32 %v601, %v1000
        %v1002 = vpop.f32.mrb[0].mxu0
        %v1003 = vadd.f32 %v597, %v1002
        %v1004 = vpop.f32.mrb[0].mxu0
        %v1005 = vadd.f32 %v601, %v1004
        %1006 = vmatprep.mubr.bf16.mxu0 %v416
        %1007 = vmatmul.mubr.bf16.gmra.mrb[0].mxu0 %v415
        %v1008 = vpop.f32.mrb[0].mxu0
        %v1009 = vadd.f32 %v597, %v1008
        %v1010 = vpop.f32.mrb[0].mxu0
        %v1011 = vadd.f32 %v601, %v1010
        %v1012 = vpop.f32.mrb[0].mxu0
        %v1013 = vadd.f32 %v597, %v1012
        %v1014 = vpop.f32.mrb[0].mxu0
        %v1015 = vadd.f32 %v601, %v1014
        %1016 = vmatprep.mubr.bf16.mxu0 %v420
        %1017 = vmatmul.mubr.bf16.gmra.mrb[0].mxu0 %v419
        %v1018 = vpop.f32.mrb[0].mxu0
        %v1019 = vadd.f32 %v597, %v1018
        %v1020 = vpop.f32.mrb[0].mxu0
        %v1021 = vadd.f32 %v601, %v1020
        %v1022 = vpop.f32.mrb[0].mxu0
        %v1023 = vadd.f32 %v597, %v1022
        %v1024 = vpop.f32.mrb[0].mxu0
        %v1025 = vadd.f32 %v601, %v1024
        %1026 = vmatprep.mubr.bf16.mxu0 %v424
        %1027 = vmatmul.mubr.bf16.gmra.mrb[0].mxu0 %v423
        %v1028 = vpop.f32.mrb[0].mxu0
        %v1029 = vadd.f32 %v597, %v1028
        %v1030 = vpop.f32.mrb[0].mxu0
        %v1031 = vadd.f32 %v601, %v1030
        %v1032 = vpop.f32.mrb[0].mxu0
        %v1033 = vadd.f32 %v597, %v1032
        %v1034 = vpop.f32.mrb[0].mxu0
        %v1035 = vadd.f32 %v601, %v1034
        %1036 = vmatprep.mubr.bf16.mxu0 %v428
        %1037 = vmatmul.mubr.bf16.gmra.mrb[0].mxu0 %v427
        %v1038 = vpop.f32.mrb[0].mxu0
        %v1039 = vadd.f32 %v597, %v1038
        %v1040 = vpop.f32.mrb[0].mxu0
        %v1041 = vadd.f32 %v601, %v1040
        %v1042 = vpop.f32.mrb[0].mxu0
        %v1043 = vadd.f32 %v597, %v1042
        %v1044 = vpop.f32.mrb[0].mxu0
        %v1045 = vadd.f32 %v601, %v1044
        %1046 = vmatprep.mubr.bf16.mxu0 %v432
        %1047 = vmatmul.mubr.bf16.gmra.mrb[0].mxu0 %v431
        %v1048 = vpop.f32.mrb[0].mxu0
        %v1049 = vadd.f32 %v597, %v1048
        %v1050 = vpop.f32.mrb[0].mxu0
        %v1051 = vadd.f32 %v601, %v1050
        %v1052 = vpop.f32.mrb[0].mxu0
        %v1053 = vadd.f32 %v597, %v1052
        %v1054 = vpop.f32.mrb[0].mxu0
        %v1055 = vadd.f32 %v601, %v1054
        %1056 = vmatprep.mubr.bf16.mxu0 %v436
        %1057 = vmatmul.mubr.bf16.gmra.mrb[0].mxu0 %v435
        %v1058 = vpop.f32.mrb[0].mxu0
        %v1059 = vadd.f32 %v597, %v1058
        %v1060 = vpop.f32.mrb[0].mxu0
        %v1061 = vadd.f32 %v601, %v1060
        %v1062 = vpop.f32.mrb[0].mxu0
        %v1063 = vadd.f32 %v597, %v1062
        %v1064 = vpop.f32.mrb[0].mxu0
        %v1065 = vadd.f32 %v601, %v1064
        %1066 = vmatprep.mubr.bf16.mxu0 %v440
        %1067 = vmatmul.mubr.bf16.gmra.mrb[0].mxu0 %v439
        %v1068 = vpop.f32.mrb[0].mxu0
        %v1069 = vadd.f32 %v597, %v1068
        %v1070 = vpop.f32.mrb[0].mxu0
        %v1071 = vadd.f32 %v601, %v1070
        %v1072 = vpop.f32.mrb[0].mxu0
        %v1073 = vadd.f32 %v597, %v1072
        %v1074 = vpop.f32.mrb[0].mxu0
        %v1075 = vadd.f32 %v601, %v1074
        %1076 = vmatprep.mubr.bf16.mxu0 %v444
        %1077 = vmatmul.mubr.bf16.gmra.mrb[0].mxu0 %v443
        %v1078 = vpop.f32.mrb[0].mxu0
        %v1079 = vadd.f32 %v597, %v1078
        %v1080 = vpop.f32.mrb[0].mxu0
        %v1081 = vadd.f32 %v601, %v1080
        %v1082 = vpop.f32.mrb[0].mxu0
        %v1083 = vadd.f32 %v597, %v1082
        %v1084 = vpop.f32.mrb[0].mxu0
        %v1085 = vadd.f32 %v601, %v1084
        %1086 = vmatprep.mubr.bf16.mxu0 %v448
        %1087 = vmatmul.mubr.bf16.gmra.mrb[0].mxu0 %v447
        %v1088 = vpop.f32.mrb[0].mxu0
        %v1089 = vadd.f32 %v597, %v1088
        %v1090 = vpop.f32.mrb[0].mxu0
        %v1091 = vadd.f32 %v601, %v1090
        %v1092 = vpop.f32.mrb[0].mxu0
        %v1093 = vadd.f32 %v597, %v1092
        %v1094 = vpop.f32.mrb[0].mxu0
        %v1095 = vadd.f32 %v601, %v1094
        %1096 = vmatprep.mubr.bf16.mxu0 %v452
        %1097 = vmatmul.mubr.bf16.gmra.mrb[0].mxu0 %v451
        %v1098 = vpop.f32.mrb[0].mxu0
        %v1099 = vadd.f32 %v597, %v1098
        %v1100 = vpop.f32.mrb[0].mxu0
        %v1101 = vadd.f32 %v601, %v1100
        %v1102 = vpop.f32.mrb[0].mxu0
        %v1103 = vadd.f32 %v597, %v1102
        %v1104 = vpop.f32.mrb[0].mxu0
        %v1105 = vadd.f32 %v601, %v1104
        %1106 = vmatprep.mubr.bf16.mxu0 %v456
        %1107 = vmatmul.mubr.bf16.gmra.mrb[0].mxu0 %v455
        %v1108 = vpop.f32.mrb[0].mxu0
        %v1109 = vadd.f32 %v597, %v1108
        %v1110 = vpop.f32.mrb[0].mxu0
        %v1111 = vadd.f32 %v601, %v1110
        %v1112 = vpop.f32.mrb[0].mxu0
        %v1113 = vadd.f32 %v597, %v1112
        %v1114 = vpop.f32.mrb[0].mxu0
        %v1115 = vadd.f32 %v601, %v1114
        %1116 = vdwg.mxu0
        %1117 = vmatprep.subr.bf16.mxu0 %v829
        %1118 = vmatpush1.bf16.msra.mxu0 %v828
        %1119 = vmatprep.subr.bf16.mxu0 %v831
        %1120 = vmatpush1.bf16.msra.mxu0 %v830
        %1121 = vmatprep.subr.bf16.mxu0 %v833
        %1122 = vmatpush1.bf16.msra.mxu0 %v832
        %1123 = vmatprep.subr.bf16.mxu0 %v835
        %1124 = vmatpush1.bf16.msra.mxu0 %v834
        %1125 = vmatprep.subr.bf16.mxu0 %v837
        %1126 = vmatpush1.bf16.msra.mxu0 %v836
        %1127 = vmatprep.subr.bf16.mxu0 %v839
        %1128 = vmatpush1.bf16.msra.mxu0 %v838
        %1129 = vmatprep.subr.bf16.mxu0 %v841
        %1130 = vmatpush1.bf16.msra.mxu0 %v840
        %1131 = vmatprep.subr.bf16.mxu0 %v843
        %1132 = vmatpush1.bf16.msra.mxu0 %v842
        %1133 = vmatprep.subr.bf16.mxu0 %v845
        %1134 = vmatpush1.bf16.msra.mxu0 %v844
        %1135 = vmatprep.subr.bf16.mxu0 %v847
        %1136 = vmatpush1.bf16.msra.mxu0 %v846
        %1137 = vmatprep.subr.bf16.mxu0 %v849
        %1138 = vmatpush1.bf16.msra.mxu0 %v848
        %1139 = vmatprep.subr.bf16.mxu0 %v851
        %1140 = vmatpush1.bf16.msra.mxu0 %v850
        %1141 = vmatprep.subr.bf16.mxu0 %v853
        %1142 = vmatpush1.bf16.msra.mxu0 %v852
        %1143 = vmatprep.subr.bf16.mxu0 %v855
        %1144 = vmatpush1.bf16.msra.mxu0 %v854
        %1145 = vmatprep.subr.bf16.mxu0 %v857
        %1146 = vmatpush1.bf16.msra.mxu0 %v856
        %1147 = vmatprep.subr.bf16.mxu0 %v859
        %1148 = vmatpush1.bf16.msra.mxu0 %v858
        %1149 = vmatprep.mubr.bf16.mxu0 %v398
        %1150 = vmatmul.mubr.bf16.gmra.mrb[0].mxu0 %v397
        %v1151 = vpop.f32.mrb[0].mxu0
        %v1152 = vadd.f32 %v959, %v1151
        %v1153 = vpop.f32.mrb[0].mxu0
        %v1154 = vadd.f32 %v961, %v1153
        %v1155 = vpop.f32.mrb[0].mxu0
        %v1156 = vadd.f32 %v963, %v1155
        %v1157 = vpop.f32.mrb[0].mxu0
        %v1158 = vadd.f32 %v965, %v1157
        %1159 = vmatprep.mubr.bf16.mxu0 %v402
        %1160 = vmatmul.mubr.bf16.gmra.mrb[0].mxu0 %v401
        %v1161 = vpop.f32.mrb[0].mxu0
        %v1162 = vadd.f32 %v969, %v1161
        %v1163 = vpop.f32.mrb[0].mxu0
        %v1164 = vadd.f32 %v971, %v1163
        %v1165 = vpop.f32.mrb[0].mxu0
        %v1166 = vadd.f32 %v973, %v1165
        %v1167 = vpop.f32.mrb[0].mxu0
        %v1168 = vadd.f32 %v975, %v1167
        %1169 = vmatprep.mubr.bf16.mxu0 %v406
        %1170 = vmatmul.mubr.bf16.gmra.mrb[0].mxu0 %v405
        %v1171 = vpop.f32.mrb[0].mxu0
        %v1172 = vadd.f32 %v979, %v1171
        %v1173 = vpop.f32.mrb[0].mxu0
        %v1174 = vadd.f32 %v981, %v1173
        %v1175 = vpop.f32.mrb[0].mxu0
        %v1176 = vadd.f32 %v983, %v1175
        %v1177 = vpop.f32.mrb[0].mxu0
        %v1178 = vadd.f32 %v985, %v1177
        %1179 = vmatprep.mubr.bf16.mxu0 %v410
        %1180 = vmatmul.mubr.bf16.gmra.mrb[0].mxu0 %v409
        %v1181 = vpop.f32.mrb[0].mxu0
        %v1182 = vadd.f32 %v989, %v1181
        %v1183 = vpop.f32.mrb[0].mxu0
        %v1184 = vadd.f32 %v991, %v1183
        %v1185 = vpop.f32.mrb[0].mxu0
        %v1186 = vadd.f32 %v993, %v1185
        %v1187 = vpop.f32.mrb[0].mxu0
        %v1188 = vadd.f32 %v995, %v1187
        %1189 = vmatprep.mubr.bf16.mxu0 %v414
        %1190 = vmatmul.mubr.bf16.gmra.mrb[0].mxu0 %v413
        %v1191 = vpop.f32.mrb[0].mxu0
        %v1192 = vadd.f32 %v999, %v1191
        %v1193 = vpop.f32.mrb[0].mxu0
        %v1194 = vadd.f32 %v1001, %v1193
        %v1195 = vpop.f32.mrb[0].mxu0
        %v1196 = vadd.f32 %v1003, %v1195
        %v1197 = vpop.f32.mrb[0].mxu0
        %v1198 = vadd.f32 %v1005, %v1197
        %1199 = vmatprep.mubr.bf16.mxu0 %v418
        %1200 = vmatmul.mubr.bf16.gmra.mrb[0].mxu0 %v417
        %v1201 = vpop.f32.mrb[0].mxu0
        %v1202 = vadd.f32 %v1009, %v1201
        %v1203 = vpop.f32.mrb[0].mxu0
        %v1204 = vadd.f32 %v1011, %v1203
        %v1205 = vpop.f32.mrb[0].mxu0
        %v1206 = vadd.f32 %v1013, %v1205
        %v1207 = vpop.f32.mrb[0].mxu0
        %v1208 = vadd.f32 %v1015, %v1207
        %1209 = vmatprep.mubr.bf16.mxu0 %v422
        %1210 = vmatmul.mubr.bf16.gmra.mrb[0].mxu0 %v421
        %v1211 = vpop.f32.mrb[0].mxu0
        %v1212 = vadd.f32 %v1019, %v1211
        %v1213 = vpop.f32.mrb[0].mxu0
        %v1214 = vadd.f32 %v1021, %v1213
        %v1215 = vpop.f32.mrb[0].mxu0
        %v1216 = vadd.f32 %v1023, %v1215
        %v1217 = vpop.f32.mrb[0].mxu0
        %v1218 = vadd.f32 %v1025, %v1217
        %1219 = vmatprep.mubr.bf16.mxu0 %v426
        %1220 = vmatmul.mubr.bf16.gmra.mrb[0].mxu0 %v425
        %v1221 = vpop.f32.mrb[0].mxu0
        %v1222 = vadd.f32 %v1029, %v1221
        %v1223 = vpop.f32.mrb[0].mxu0
        %v1224 = vadd.f32 %v1031, %v1223
        %v1225 = vpop.f32.mrb[0].mxu0
        %v1226 = vadd.f32 %v1033, %v1225
        %v1227 = vpop.f32.mrb[0].mxu0
        %v1228 = vadd.f32 %v1035, %v1227
        %1229 = vmatprep.mubr.bf16.mxu0 %v430
        %1230 = vmatmul.mubr.bf16.gmra.mrb[0].mxu0 %v429
        %v1231 = vpop.f32.mrb[0].mxu0
        %v1232 = vadd.f32 %v1039, %v1231
        %v1233 = vpop.f32.mrb[0].mxu0
        %v1234 = vadd.f32 %v1041, %v1233
        %v1235 = vpop.f32.mrb[0].mxu0
        %v1236 = vadd.f32 %v1043, %v1235
        %v1237 = vpop.f32.mrb[0].mxu0
        %v1238 = vadd.f32 %v1045, %v1237
        %1239 = vmatprep.mubr.bf16.mxu0 %v434
        %1240 = vmatmul.mubr.bf16.gmra.mrb[0].mxu0 %v433
        %v1241 = vpop.f32.mrb[0].mxu0
        %v1242 = vadd.f32 %v1049, %v1241
        %v1243 = vpop.f32.mrb[0].mxu0
        %v1244 = vadd.f32 %v1051, %v1243
        %v1245 = vpop.f32.mrb[0].mxu0
        %v1246 = vadd.f32 %v1053, %v1245
        %v1247 = vpop.f32.mrb[0].mxu0
        %v1248 = vadd.f32 %v1055, %v1247
        %1249 = vmatprep.mubr.bf16.mxu0 %v438
        %1250 = vmatmul.mubr.bf16.gmra.mrb[0].mxu0 %v437
        %v1251 = vpop.f32.mrb[0].mxu0
        %v1252 = vadd.f32 %v1059, %v1251
        %v1253 = vpop.f32.mrb[0].mxu0
        %v1254 = vadd.f32 %v1061, %v1253
        %v1255 = vpop.f32.mrb[0].mxu0
        %v1256 = vadd.f32 %v1063, %v1255
        %v1257 = vpop.f32.mrb[0].mxu0
        %v1258 = vadd.f32 %v1065, %v1257
        %1259 = vmatprep.mubr.bf16.mxu0 %v442
        %1260 = vmatmul.mubr.bf16.gmra.mrb[0].mxu0 %v441
        %v1261 = vpop.f32.mrb[0].mxu0
        %v1262 = vadd.f32 %v1069, %v1261
        %v1263 = vpop.f32.mrb[0].mxu0
        %v1264 = vadd.f32 %v1071, %v1263
        %v1265 = vpop.f32.mrb[0].mxu0
        %v1266 = vadd.f32 %v1073, %v1265
        %v1267 = vpop.f32.mrb[0].mxu0
        %v1268 = vadd.f32 %v1075, %v1267
        %1269 = vmatprep.mubr.bf16.mxu0 %v446
        %1270 = vmatmul.mubr.bf16.gmra.mrb[0].mxu0 %v445
        %v1271 = vpop.f32.mrb[0].mxu0
        %v1272 = vadd.f32 %v1079, %v1271
        %v1273 = vpop.f32.mrb[0].mxu0
        %v1274 = vadd.f32 %v1081, %v1273
        %v1275 = vpop.f32.mrb[0].mxu0
        %v1276 = vadd.f32 %v1083, %v1275
        %v1277 = vpop.f32.mrb[0].mxu0
        %v1278 = vadd.f32 %v1085, %v1277
        %1279 = vmatprep.mubr.bf16.mxu0 %v450
        %1280 = vmatmul.mubr.bf16.gmra.mrb[0].mxu0 %v449
        %v1281 = vpop.f32.mrb[0].mxu0
        %v1282 = vadd.f32 %v1089, %v1281
        %v1283 = vpop.f32.mrb[0].mxu0
        %v1284 = vadd.f32 %v1091, %v1283
        %v1285 = vpop.f32.mrb[0].mxu0
        %v1286 = vadd.f32 %v1093, %v1285
        %v1287 = vpop.f32.mrb[0].mxu0
        %v1288 = vadd.f32 %v1095, %v1287
        %1289 = vmatprep.mubr.bf16.mxu0 %v454
        %1290 = vmatmul.mubr.bf16.gmra.mrb[0].mxu0 %v453
        %v1291 = vpop.f32.mrb[0].mxu0
        %v1292 = vadd.f32 %v1099, %v1291
        %v1293 = vpop.f32.mrb[0].mxu0
        %v1294 = vadd.f32 %v1101, %v1293
        %v1295 = vpop.f32.mrb[0].mxu0
        %v1296 = vadd.f32 %v1103, %v1295
        %v1297 = vpop.f32.mrb[0].mxu0
        %v1298 = vadd.f32 %v1105, %v1297
        %1299 = vmatprep.mubr.bf16.mxu0 %v458
        %1300 = vmatmul.mubr.bf16.gmra.mrb[0].mxu0 %v457
        %v1301 = vpop.f32.mrb[0].mxu0
        %v1302 = vadd.f32 %v1109, %v1301
        %v1303 = vpop.f32.mrb[0].mxu0
        %v1304 = vadd.f32 %v1111, %v1303
        %v1305 = vpop.f32.mrb[0].mxu0
        %v1306 = vadd.f32 %v1113, %v1305
        %v1307 = vpop.f32.mrb[0].mxu0
        %v1308 = vadd.f32 %v1115, %v1307
        %1309 = vdwg.mxu0
        %v1310 = vadd.f32 %v1152, %v528
        %v1311 = vadd.f32 %v1154, %v529
        %v1312 = vadd.f32 %v1156, %v530
        %v1313 = vadd.f32 %v1158, %v531
        %v1314 = vadd.f32 %v1162, %v532
        %v1315 = vadd.f32 %v1164, %v533
        %v1316 = vadd.f32 %v1166, %v534
        %v1317 = vadd.f32 %v1168, %v535
        %v1318 = vadd.f32 %v1172, %v536
        %v1319 = vadd.f32 %v1174, %v537
        %v1320 = vadd.f32 %v1176, %v538
        %v1321 = vadd.f32 %v1178, %v539
        %v1322 = vadd.f32 %v1182, %v540
        %v1323 = vadd.f32 %v1184, %v541
        %v1324 = vadd.f32 %v1186, %v542
        %v1325 = vadd.f32 %v1188, %v543
        %v1326 = vadd.f32 %v1192, %v544
        %v1327 = vadd.f32 %v1194, %v545
        %v1328 = vadd.f32 %v1196, %v546
        %v1329 = vadd.f32 %v1198, %v547
        %v1330 = vadd.f32 %v1202, %v548
        %v1331 = vadd.f32 %v1204, %v549
        %v1332 = vadd.f32 %v1206, %v550
        %v1333 = vadd.f32 %v1208, %v551
        %v1334 = vadd.f32 %v1212, %v552
        %v1335 = vadd.f32 %v1214, %v553
        %v1336 = vadd.f32 %v1216, %v554
        %v1337 = vadd.f32 %v1218, %v555
        %v1338 = vadd.f32 %v1222, %v556
        %v1339 = vadd.f32 %v1224, %v557
        %v1340 = vadd.f32 %v1226, %v558
        %v1341 = vadd.f32 %v1228, %v559
        %v1342 = vadd.f32 %v1232, %v560
        %v1343 = vadd.f32 %v1234, %v561
        %v1344 = vadd.f32 %v1236, %v562
        %v1345 = vadd.f32 %v1238, %v563
        %v1346 = vadd.f32 %v1242, %v564
        %v1347 = vadd.f32 %v1244, %v565
        %v1348 = vadd.f32 %v1246, %v566
        %v1349 = vadd.f32 %v1248, %v567
        %v1350 = vadd.f32 %v1252, %v568
        %v1351 = vadd.f32 %v1254, %v569
        %v1352 = vadd.f32 %v1256, %v570
        %v1353 = vadd.f32 %v1258, %v571
        %v1354 = vadd.f32 %v1262, %v572
        %v1355 = vadd.f32 %v1264, %v573
        %v1356 = vadd.f32 %v1266, %v574
        %v1357 = vadd.f32 %v1268, %v575
        %v1358 = vadd.f32 %v1272, %v576
        %v1359 = vadd.f32 %v1274, %v577
        %v1360 = vadd.f32 %v1276, %v578
        %v1361 = vadd.f32 %v1278, %v579
        %v1362 = vadd.f32 %v1282, %v580
        %v1363 = vadd.f32 %v1284, %v581
        %v1364 = vadd.f32 %v1286, %v582
        %v1365 = vadd.f32 %v1288, %v583
        %v1366 = vadd.f32 %v1292, %v584
        %v1367 = vadd.f32 %v1294, %v585
        %v1368 = vadd.f32 %v1296, %v586
        %v1369 = vadd.f32 %v1298, %v587
        %v1370 = vadd.f32 %v1302, %v588
        %v1371 = vadd.f32 %v1304, %v589
        %v1372 = vadd.f32 %v1306, %v590
        %v1373 = vadd.f32 %v1308, %v591
        %1374 = vst [vmem:[%s257] sm:$0xff] %v1310
        %1375 = vst [vmem:[%s257 + $0x8] sm:$0xff] %v1311
        %1376 = vst [vmem:[%s257 + $0x10] sm:$0xff] %v1312
        %1377 = vst [vmem:[%s257 + $0x18] sm:$0xff] %v1313
        %1378 = vst [vmem:[%s257 + $0x20] sm:$0xff] %v1314
        %1379 = vst [vmem:[%s257 + $0x28] sm:$0xff] %v1315
        %1380 = vst [vmem:[%s257 + $0x30] sm:$0xff] %v1316
        %1381 = vst [vmem:[%s257 + $0x38] sm:$0xff] %v1317
        %1382 = vst [vmem:[%s257 + $0x40] sm:$0xff] %v1318
        %1383 = vst [vmem:[%s257 + $0x48] sm:$0xff] %v1319
        %1384 = vst [vmem:[%s257 + $0x50] sm:$0xff] %v1320
        %1385 = vst [vmem:[%s257 + $0x58] sm:$0xff] %v1321
        %1386 = vst [vmem:[%s257 + $0x60] sm:$0xff] %v1322
        %1387 = vst [vmem:[%s257 + $0x68] sm:$0xff] %v1323
        %1388 = vst [vmem:[%s257 + $0x70] sm:$0xff] %v1324
        %1389 = vst [vmem:[%s257 + $0x78] sm:$0xff] %v1325
        %1390 = vst [vmem:[%s257 + $0x80] sm:$0xff] %v1326
        %1391 = vst [vmem:[%s257 + $0x88] sm:$0xff] %v1327
        %1392 = vst [vmem:[%s257 + $0x90] sm:$0xff] %v1328
        %1393 = vst [vmem:[%s257 + $0x98] sm:$0xff] %v1329
        %1394 = vst [vmem:[%s257 + $0xa0] sm:$0xff] %v1330
        %1395 = vst [vmem:[%s257 + $0xa8] sm:$0xff] %v1331
        %1396 = vst [vmem:[%s257 + $0xb0] sm:$0xff] %v1332
        %1397 = vst [vmem:[%s257 + $0xb8] sm:$0xff] %v1333
        %1398 = vst [vmem:[%s257 + $0xc0] sm:$0xff] %v1334
        %1399 = vst [vmem:[%s257 + $0xc8] sm:$0xff] %v1335
        %1400 = vst [vmem:[%s257 + $0xd0] sm:$0xff] %v1336
        %1401 = vst [vmem:[%s257 + $0xd8] sm:$0xff] %v1337
        %1402 = vst [vmem:[%s257 + $0xe0] sm:$0xff] %v1338
        %1403 = vst [vmem:[%s257 + $0xe8] sm:$0xff] %v1339
        %1404 = vst [vmem:[%s257 + $0xf0] sm:$0xff] %v1340
        %1405 = vst [vmem:[%s257 + $0xf8] sm:$0xff] %v1341
        %1406 = vst [vmem:[%s257 + $0x100] sm:$0xff] %v1342
        %1407 = vst [vmem:[%s257 + $0x108] sm:$0xff] %v1343
        %1408 = vst [vmem:[%s257 + $0x110] sm:$0xff] %v1344
        %1409 = vst [vmem:[%s257 + $0x118] sm:$0xff] %v1345
        %1410 = vst [vmem:[%s257 + $0x120] sm:$0xff] %v1346
        %1411 = vst [vmem:[%s257 + $0x128] sm:$0xff] %v1347
        %1412 = vst [vmem:[%s257 + $0x130] sm:$0xff] %v1348
        %1413 = vst [vmem:[%s257 + $0x138] sm:$0xff] %v1349
        %1414 = vst [vmem:[%s257 + $0x140] sm:$0xff] %v1350
        %1415 = vst [vmem:[%s257 + $0x148] sm:$0xff] %v1351
        %1416 = vst [vmem:[%s257 + $0x150] sm:$0xff] %v1352
        %1417 = vst [vmem:[%s257 + $0x158] sm:$0xff] %v1353
        %1418 = vst [vmem:[%s257 + $0x160] sm:$0xff] %v1354
        %1419 = vst [vmem:[%s257 + $0x168] sm:$0xff] %v1355
        %1420 = vst [vmem:[%s257 + $0x170] sm:$0xff] %v1356
        %1421 = vst [vmem:[%s257 + $0x178] sm:$0xff] %v1357
        %1422 = vst [vmem:[%s257 + $0x180] sm:$0xff] %v1358
        %1423 = vst [vmem:[%s257 + $0x188] sm:$0xff] %v1359
        %1424 = vst [vmem:[%s257 + $0x190] sm:$0xff] %v1360
        %1425 = vst [vmem:[%s257 + $0x198] sm:$0xff] %v1361
        %1426 = vst [vmem:[%s257 + $0x1a0] sm:$0xff] %v1362
        %1427 = vst [vmem:[%s257 + $0x1a8] sm:$0xff] %v1363
        %1428 = vst [vmem:[%s257 + $0x1b0] sm:$0xff] %v1364
        %1429 = vst [vmem:[%s257 + $0x1b8] sm:$0xff] %v1365
        %1430 = vst [vmem:[%s257 + $0x1c0] sm:$0xff] %v1366
        %1431 = vst [vmem:[%s257 + $0x1c8] sm:$0xff] %v1367
        %1432 = vst [vmem:[%s257 + $0x1d0] sm:$0xff] %v1368
        %1433 = vst [vmem:[%s257 + $0x1d8] sm:$0xff] %v1369
        %1434 = vst [vmem:[%s257 + $0x1e0] sm:$0xff] %v1370
        %1435 = vst [vmem:[%s257 + $0x1e8] sm:$0xff] %v1371
        %1436 = vst [vmem:[%s257 + $0x1f0] sm:$0xff] %v1372
        %1437 = vst [vmem:[%s257 + $0x1f8] sm:$0xff] %v1373
        %s1438 = sand.u32 %s123, 1
        %s1439 = scalar_lea.sflag [#allocation4], %s1438
        %s1440 = sand.u32 %s123, 1
        %s1441 = smul.addr %s1440, 512
        %s1442 = scalar_lea.vmem [#allocation7], %s1441
        // Predicated region
        $region41: #{tpu_custom_call.1} parent=31 // pred_check
          %p1443 = pneg %p133
        $region42: #{tpu_custom_call.1} parent=31 // pred_check_branch
          %1445 = sbr.rel (%p1443) target = $region44
        $region43: #{tpu_custom_call.1} parent=31 // pred_region
          %s1446 = smul.u32 32, %s27
          %s1447 = smul.u32 2, %s28
          %s1449 = ssub.s32 8192, 8192
          %1450 = vsyncadd %s1439, %s1449
          %s1451 = smul.addr %s1446, 4
          %s1452 = sadd.s32 %s1447, %s1451
          %s1453 = smul.addr %s1452, 128
          %s1454 = scalar_lea.hbm %s3, %s1453
          %s1455 = sshll.u32 %s1442, 4
          %s1456 = int_to_ptr.vmem [resolvable:$true] %s1455
          %1461 = dma.vmem_to_hbm [thread:$0]  %s1456, 8192, %s1454, %s1439, 256, 512, 16
        $region44: #{tpu_custom_call.1} parent=31 // pred_fallthru
          _
      $region32: #{tpu_custom_call.1} parent=5 // pred_fallthru
        _
      %p1462 = scmp.le.s32.totalorder 2, %s18
      // Predicated region
      $region45: #{tpu_custom_call.1} parent=5 // pred_check
        %p1463 = pneg %p1462
      $region46: #{tpu_custom_call.1} parent=5 // pred_check_branch
        %1465 = sbr.rel (%p1463) target = $region48
      $region47: #{tpu_custom_call.1} parent=5 // pred_region
        %s1466 = ssub.s32 %s18, 2
        // Predicated region
        $region49: #{tpu_custom_call.1} parent=47 // pred_check
          %p1467 = pneg %p139
        $region50: #{tpu_custom_call.1} parent=47 // pred_check_branch
          %1469 = sbr.rel (%p1467) target = $region52
        $region51: #{tpu_custom_call.1} parent=47 // pred_region
          %s1470 = sand.u32 %s124, 1
          %s1471 = scalar_lea.sflag [#allocation4], %s1470
          %s1472 = sand.u32 %s124, 1
          %s1473 = smul.addr %s1472, 512
          %s1474 = scalar_lea.vmem [#allocation7], %s1473
          %1475 = dma.done %s1471, 8192
        $region52: #{tpu_custom_call.1} parent=47 // pred_fallthru
          _
      $region48: #{tpu_custom_call.1} parent=5 // pred_fallthru
        _
    $region6: #{tpu_custom_call.1} parent=1 // loop_footer
      %s22 = sadd.s32 1, %s18
    $region7: #{tpu_custom_call.1} parent=1 // loop_footer_branch
      %17 = sbr.rel target = $region3
    $region8: #{tpu_custom_call.1} parent=1 // loop_exit
      _
    %1476 = vsyncpa [#allocation3], 1
    %s1477 = scalar_lea.sflag [#allocation3], 1
    %1478 = vsyncpa %s1477, 1
    %1479 = vsyncpa [#allocation6], 1
    %s1480 = scalar_lea.sflag [#allocation6], 1
    %1481 = vsyncpa %s1480, 1
    %1482 = vsyncpa [#allocation4], 1
    %s1483 = scalar_lea.sflag [#allocation4], 1
    %1484 = vsyncpa %s1483, 1

</llo_original>
